<compile_context>
chip_gen: v6e
topology: v6e:2x2x1
jax: 0.10.0
libtpu: 0.0.40
codegen_flags: <defaults>
</compile_context>

<pallas_src>
import functools

import jax
import jax.numpy as jnp
from jax.experimental import pallas as pl
from jax.experimental.pallas import tpu as pltpu

IN_SIZE = 3       # in_size: input / output channels
BASE = 64         # project conv output channels
KP = 7            # project conv kernel size
PAD = 3           # project conv padding
EPS = 1e-5        # nn.InstanceNorm2d default eps (affine=False, no running stats)
COUT_PAD = 8      # predict output channels padded to a full sublane group


def _round_up(x, m):
    return (x + m - 1) // m * m


def _udenoiser_kernel(x_ref, wproj_ref, wpred_ref, bpred_ref, mask_ref,
                      out_ref, patch_ref, *, c_in, wp_row, nwide, kc, kc_pad,
                      n_valid):
    """One batch element, channel-major.

    x_ref    : (1, C, NP)      bf16  padded image, spatially flattened (+ shift-tail pad)
    wproj_ref: (64, KC_PAD)    bf16  7x7 weights, rows ordered (kh, kw, cin), K zero-padded
    wpred_ref: (8, 64)         f32   1x1 weights, rows >= C are zero
    bpred_ref: (8, 1)          f32   1x1 bias,    rows >= C are zero
    mask_ref : (1, NWIDE)      f32   1.0 on valid columns (col = h*Wp + w, w < W), else 0.0
    out_ref  : (1, 8, NWIDE)   f32   channel-major "wide" output (junk in masked columns)
    patch_ref: (KC_PAD, NWIDE) f32   VMEM scratch holding the on-chip im2col matrix
    """
    # Load + upcast the (tiny) padded image once; all patch rows are static slices.
    xf = x_ref[0].astype(jnp.float32)                                   # (C, NP)

    # ---- on-chip im2col: row (kh*KP + kw)*C + cin = image row cin shifted by kh*Wp+kw ----
    for k in range(KP * KP):
        kh, kw = divmod(k, KP)
        off = kh * wp_row + kw
        patch_ref[k * c_in:(k + 1) * c_in, :] = xf[:, off:off + nwide]
    # Zero the K-padding rows (their weights are zero, but stale VMEM could hold NaN).
    if kc_pad > kc:
        patch_ref[kc:, :] = jnp.zeros((kc_pad - kc, nwide), jnp.float32)

    # ---- self.project: Conv2d(C, 64, 7, padding=3) as ONE bf16 MXU matmul ----
    feat = jnp.dot(wproj_ref[...], patch_ref[...].astype(jnp.bfloat16),
                   preferred_element_type=jnp.float32)                  # (64, NWIDE) f32
    # Projection bias omitted on purpose: a per-channel constant is exactly cancelled
    # by the InstanceNorm mean subtraction below.

    # TODO(synk): UNetBackbone / NonLocal / IgnoreArgs definitions were not provided
    # with the module source, so self.bb (and its use of the time embedding) is
    # treated as identity here rather than faked.

    # ---- self.predict_bn: InstanceNorm2d (affine=False, eps=1e-5) ----
    # Single-pass masked stats over valid spatial columns (lane-axis XLU reduce).
    m = mask_ref[...]                                                   # (1, NWIDE)
    fm = feat * m
    s1 = jnp.sum(fm, axis=1, keepdims=True)                             # (64, 1)
    s2 = jnp.sum(fm * fm, axis=1, keepdims=True)                        # (64, 1)
    mean = s1 * (1.0 / n_valid)
    var = jnp.maximum(s2 * (1.0 / n_valid) - mean * mean, 0.0)          # clamp >= 0
    inv = jax.lax.rsqrt(var + EPS)                                      # (64, 1)

    # ---- self.predict: Conv2d(64, C, 1) as a small f32 matmul ----
    # (The per-channel affine could be folded into wpred/bias, but that needs a
    #  (64,1)->(1,64) relayout or a matvec; the two column-broadcast VALU ops below
    #  are negligible next to the MXU/HBM cost and keep the most-supported lowering
    #  path.  Kept in f32 so the normalization arithmetic stays exact.)
    normed = (feat - mean) * inv                                        # (64, NWIDE)
    out = jnp.dot(wpred_ref[...], normed,
                  preferred_element_type=jnp.float32) + bpred_ref[...]  # (8, NWIDE)
    out_ref[0] = out.astype(out_ref.dtype)


def time_embedding(time):
    # Matches UDenoiser.time_embedding: [sin(t/1000^(i/100)) for i<50] ++ cos(...)
    t = time.astype(jnp.float32)[:, None]                 # (B, 1)
    idx = jnp.arange(50, dtype=jnp.float32)
    scale = 1000.0 ** (idx / 100.0)                       # (50,)
    return jnp.concatenate([jnp.sin(t / scale), jnp.cos(t / scale)], axis=1)


def udenoiser_forward(x_nchw, time, params):
    B, C, H, W = x_nchw.shape
    Hp, Wp = H + 2 * PAD, W + 2 * PAD
    nwide_raw = H * Wp                                # "wide" output: H rows x Wp cols
    NWIDE = _round_up(nwide_raw, 128)                 # lane-dense compute / store width
    NP = _round_up((KP - 1) * Wp + (KP - 1) + NWIDE, 128)  # input cols incl. shift tail
    KC = KP * KP * C
    KC_PAD = _round_up(KC, 16)

    # Time embedding (consumed only by the stubbed backbone; computed to mirror forward).
    _t_emb = time_embedding(time)

    # ---- layout glue: zero padding only (no 49x im2col expansion), bf16 input stream ----
    x_bf = x_nchw.astype(jnp.bfloat16)
    xpad = jnp.pad(x_bf, ((0, 0), (0, 0), (PAD, PAD), (PAD, PAD)))
    xflat = xpad.reshape(B, C, Hp * Wp)
    xflat = jnp.pad(xflat, ((0, 0), (0, 0), (0, NP - Hp * Wp)))          # (B, C, NP)

    # 7x7 weights: PyTorch OIHW -> (64, KC) rows ordered (kh, kw, cin); zero-pad K; bf16.
    wt = jnp.transpose(params["wproj"], (0, 2, 3, 1)).reshape(BASE, KC)
    wt = jnp.pad(wt, ((0, 0), (0, KC_PAD - KC))).astype(jnp.bfloat16)    # (64, KC_PAD)
    # params["bproj"] intentionally unused: exactly cancelled by InstanceNorm.

    # 1x1 weights / bias padded to 8 output rows (full sublane group -> unmasked stores).
    wp = jnp.zeros((COUT_PAD, BASE), jnp.float32).at[:C].set(
        params["wpred"].astype(jnp.float32))
    bp = jnp.zeros((COUT_PAD, 1), jnp.float32).at[:C, 0].set(
        params["bpred"].astype(jnp.float32))

    # Valid-column mask in the wide layout: col = h*Wp + w with h < H and w < W.
    col = jnp.arange(NWIDE)
    mask = ((col < nwide_raw) & ((col % Wp) < W)).astype(jnp.float32)[None, :]

    kernel = functools.partial(
        _udenoiser_kernel, c_in=C, wp_row=Wp, nwide=NWIDE, kc=KC, kc_pad=KC_PAD,
        n_valid=float(H * W))

    out_wide = pl.pallas_call(
        kernel,
        out_shape=jax.ShapeDtypeStruct((B, COUT_PAD, NWIDE), jnp.float32),
        grid_spec=pltpu.PrefetchScalarGridSpec(
            num_scalar_prefetch=0,
            grid=(B,),
            in_specs=[
                pl.BlockSpec((1, C, NP), lambda b: (b, 0, 0)),
                pl.BlockSpec((BASE, KC_PAD), lambda b: (0, 0)),
                pl.BlockSpec((COUT_PAD, BASE), lambda b: (0, 0)),
                pl.BlockSpec((COUT_PAD, 1), lambda b: (0, 0)),
                pl.BlockSpec((1, NWIDE), lambda b: (0, 0)),
            ],
            out_specs=pl.BlockSpec((1, COUT_PAD, NWIDE), lambda b: (b, 0, 0)),
            scratch_shapes=[pltpu.VMEM((KC_PAD, NWIDE), jnp.float32)],
        ),
        compiler_params=pltpu.CompilerParams(
            dimension_semantics=("parallel",),      # B >= 2 -> both v7x TCs get work
            vmem_limit_bytes=32 * 1024 * 1024,
        ),
    )(xflat, wt, wp, bp, mask)

    # Slice valid channels / pixels back out and return NCHW (PyTorch convention).
    out = out_wide[:, :C, :nwide_raw].reshape(B, C, H, Wp)
    return out[:, :, :, :W]


def reference_forward(x_nchw, time, params):
    """Pure-JAX f32 reference with the same identity-backbone stub (for validation)."""
    x = x_nchw.astype(jnp.float32)
    feat = jax.lax.conv_general_dilated(
        x, params["wproj"].astype(jnp.float32), window_strides=(1, 1),
        padding=((PAD, PAD), (PAD, PAD)),
        dimension_numbers=("NCHW", "OIHW", "NCHW"))
    feat = feat + params["bproj"][None, :, None, None]
    mean = jnp.mean(feat, axis=(2, 3), keepdims=True)
    var = jnp.mean((feat - mean) ** 2, axis=(2, 3), keepdims=True)
    normed = (feat - mean) * jax.lax.rsqrt(var + EPS)
    out = jnp.einsum("bchw,oc->bohw", normed, params["wpred"].astype(jnp.float32))
    return out + params["bpred"][None, :, None, None]


if __name__ == "__main__":
    key = jax.random.PRNGKey(0)
    kx, k1, k2, k3, k4 = jax.random.split(key, 5)

    B, C, H, W = 2, IN_SIZE, 16, 16
    x = jax.random.normal(kx, (B, C, H, W), jnp.float32)
    t = jnp.array([5, 250], dtype=jnp.int32)

    # deterministic synthetic parameters, PyTorch layouts (shapes follow UDenoiser.__init__)
    params = {
        "wproj": 0.05 * jax.random.normal(k1, (BASE, C, KP, KP), jnp.float32),  # OIHW
        "bproj": 0.05 * jax.random.normal(k2, (BASE,), jnp.float32),
        "wpred": 0.05 * jax.random.normal(k3, (C, BASE), jnp.float32),          # (out, in)
        "bpred": 0.05 * jax.random.normal(k4, (C,), jnp.float32),
    }

    out = jax.block_until_ready(udenoiser_forward(x, t, params))
    assert out.shape == (B, C, H, W)

    ref = reference_forward(x, t, params)
    max_err = float(jnp.max(jnp.abs(out - ref)))
    if not jnp.allclose(out, ref, atol=2e-2, rtol=2e-2):   # bf16 projection matmul tolerance
        raise AssertionError(
            f"Pallas kernel output mismatch vs JAX reference (max abs err {max_err})")

    print("KERNEL_OK")
</pallas_src>

<mosaic_0001>
module attributes {stable_mosaic.version = 11 : i64} {
  func.func @_udenoiser_kernel(%arg0: i32, %arg1: memref<1x3x640xbf16, #tpu.memory_space<vmem>>, %arg2: memref<64x160xbf16, #tpu.memory_space<vmem>>, %arg3: memref<8x64xf32, #tpu.memory_space<vmem>>, %arg4: memref<8x1xf32, #tpu.memory_space<vmem>>, %arg5: memref<1x384xf32, #tpu.memory_space<vmem>>, %arg6: memref<1x8x384xf32, #tpu.memory_space<vmem>>, %arg7: memref<160x384xf32, #tpu.memory_space<vmem>>) attributes {dimension_semantics = [#tpu.dimension_semantics<parallel>], iteration_bounds = array<i64: 2>, scalar_prefetch = 0 : i64, scratch_operands = 1 : i64, tpu.core_type = #tpu.core_type<tc>, window_params = [{transform_indices = @transform_0, window_bounds = array<i64: 1, 3, 640>}, {pipeline_mode = #tpu.pipeline_mode<synchronous>, transform_indices = @transform_1, window_bounds = array<i64: 64, 160>}, {pipeline_mode = #tpu.pipeline_mode<synchronous>, transform_indices = @transform_2, window_bounds = array<i64: 8, 64>}, {pipeline_mode = #tpu.pipeline_mode<synchronous>, transform_indices = @transform_3, window_bounds = array<i64: 8, 1>}, {pipeline_mode = #tpu.pipeline_mode<synchronous>, transform_indices = @transform_4, window_bounds = array<i64: 1, 384>}, {transform_indices = @transform_5, window_bounds = array<i64: 1, 8, 384>}]} {
    %c0 = arith.constant 0 : index
    %c0_0 = arith.constant 0 : index
    %c0_1 = arith.constant 0 : index
    %0 = vector.load %arg1[%c0, %c0_0, %c0_1] : memref<1x3x640xbf16, #tpu.memory_space<vmem>>, vector<1x3x640xbf16>
    %1 = vector.shape_cast %0 : vector<1x3x640xbf16> to vector<3x640xbf16>
    %2 = arith.extf %1 : vector<3x640xbf16> to vector<3x640xf32>
    %3 = vector.extract_strided_slice %2 {offsets = [0, 0], sizes = [3, 384], strides = [1, 1]} : vector<3x640xf32> to vector<3x384xf32>
    %c0_2 = arith.constant 0 : index
    %c0_3 = arith.constant 0 : index
    %4 = vector.load %arg7[%c0_2, %c0_3] : memref<160x384xf32, #tpu.memory_space<vmem>>, vector<3x384xf32>
    tpu.vector_store %arg7[%c0_2, %c0_3], %3 {strides = array<i32>} : memref<160x384xf32, #tpu.memory_space<vmem>>, vector<3x384xf32>,
    %5 = vector.extract_strided_slice %2 {offsets = [0, 1], sizes = [3, 384], strides = [1, 1]} : vector<3x640xf32> to vector<3x384xf32>
    %c3 = arith.constant 3 : index
    %c0_4 = arith.constant 0 : index
    %6 = vector.load %arg7[%c3, %c0_4] : memref<160x384xf32, #tpu.memory_space<vmem>>, vector<3x384xf32>
    tpu.vector_store %arg7[%c3, %c0_4], %5 {strides = array<i32>} : memref<160x384xf32, #tpu.memory_space<vmem>>, vector<3x384xf32>,
    %7 = vector.extract_strided_slice %2 {offsets = [0, 2], sizes = [3, 384], strides = [1, 1]} : vector<3x640xf32> to vector<3x384xf32>
    %c6 = arith.constant 6 : index
    %c0_5 = arith.constant 0 : index
    %8 = vector.load %arg7[%c6, %c0_5] : memref<160x384xf32, #tpu.memory_space<vmem>>, vector<3x384xf32>
    tpu.vector_store %arg7[%c6, %c0_5], %7 {strides = array<i32>} : memref<160x384xf32, #tpu.memory_space<vmem>>, vector<3x384xf32>,
    %9 = vector.extract_strided_slice %2 {offsets = [0, 3], sizes = [3, 384], strides = [1, 1]} : vector<3x640xf32> to vector<3x384xf32>
    %c9 = arith.constant 9 : index
    %c0_6 = arith.constant 0 : index
    %10 = vector.load %arg7[%c9, %c0_6] : memref<160x384xf32, #tpu.memory_space<vmem>>, vector<3x384xf32>
    tpu.vector_store %arg7[%c9, %c0_6], %9 {strides = array<i32>} : memref<160x384xf32, #tpu.memory_space<vmem>>, vector<3x384xf32>,
    %11 = vector.extract_strided_slice %2 {offsets = [0, 4], sizes = [3, 384], strides = [1, 1]} : vector<3x640xf32> to vector<3x384xf32>
    %c12 = arith.constant 12 : index
    %c0_7 = arith.constant 0 : index
    %12 = vector.load %arg7[%c12, %c0_7] : memref<160x384xf32, #tpu.memory_space<vmem>>, vector<3x384xf32>
    tpu.vector_store %arg7[%c12, %c0_7], %11 {strides = array<i32>} : memref<160x384xf32, #tpu.memory_space<vmem>>, vector<3x384xf32>,
    %13 = vector.extract_strided_slice %2 {offsets = [0, 5], sizes = [3, 384], strides = [1, 1]} : vector<3x640xf32> to vector<3x384xf32>
    %c15 = arith.constant 15 : index
    %c0_8 = arith.constant 0 : index
    %14 = vector.load %arg7[%c15, %c0_8] : memref<160x384xf32, #tpu.memory_space<vmem>>, vector<3x384xf32>
    tpu.vector_store %arg7[%c15, %c0_8], %13 {strides = array<i32>} : memref<160x384xf32, #tpu.memory_space<vmem>>, vector<3x384xf32>,
    %15 = vector.extract_strided_slice %2 {offsets = [0, 6], sizes = [3, 384], strides = [1, 1]} : vector<3x640xf32> to vector<3x384xf32>
    %c18 = arith.constant 18 : index
    %c0_9 = arith.constant 0 : index
    %16 = vector.load %arg7[%c18, %c0_9] : memref<160x384xf32, #tpu.memory_space<vmem>>, vector<3x384xf32>
    tpu.vector_store %arg7[%c18, %c0_9], %15 {strides = array<i32>} : memref<160x384xf32, #tpu.memory_space<vmem>>, vector<3x384xf32>,
    %17 = vector.extract_strided_slice %2 {offsets = [0, 22], sizes = [3, 384], strides = [1, 1]} : vector<3x640xf32> to vector<3x384xf32>
    %c21 = arith.constant 21 : index
    %c0_10 = arith.constant 0 : index
    %18 = vector.load %arg7[%c21, %c0_10] : memref<160x384xf32, #tpu.memory_space<vmem>>, vector<3x384xf32>
    tpu.vector_store %arg7[%c21, %c0_10], %17 {strides = array<i32>} : memref<160x384xf32, #tpu.memory_space<vmem>>, vector<3x384xf32>,
    %19 = vector.extract_strided_slice %2 {offsets = [0, 23], sizes = [3, 384], strides = [1, 1]} : vector<3x640xf32> to vector<3x384xf32>
    %c24 = arith.constant 24 : index
    %c0_11 = arith.constant 0 : index
    %20 = vector.load %arg7[%c24, %c0_11] : memref<160x384xf32, #tpu.memory_space<vmem>>, vector<3x384xf32>
    tpu.vector_store %arg7[%c24, %c0_11], %19 {strides = array<i32>} : memref<160x384xf32, #tpu.memory_space<vmem>>, vector<3x384xf32>,
    %21 = vector.extract_strided_slice %2 {offsets = [0, 24], sizes = [3, 384], strides = [1, 1]} : vector<3x640xf32> to vector<3x384xf32>
    %c27 = arith.constant 27 : index
    %c0_12 = arith.constant 0 : index
    %22 = vector.load %arg7[%c27, %c0_12] : memref<160x384xf32, #tpu.memory_space<vmem>>, vector<3x384xf32>
    tpu.vector_store %arg7[%c27, %c0_12], %21 {strides = array<i32>} : memref<160x384xf32, #tpu.memory_space<vmem>>, vector<3x384xf32>,
    %23 = vector.extract_strided_slice %2 {offsets = [0, 25], sizes = [3, 384], strides = [1, 1]} : vector<3x640xf32> to vector<3x384xf32>
    %c30 = arith.constant 30 : index
    %c0_13 = arith.constant 0 : index
    %24 = vector.load %arg7[%c30, %c0_13] : memref<160x384xf32, #tpu.memory_space<vmem>>, vector<3x384xf32>
    tpu.vector_store %arg7[%c30, %c0_13], %23 {strides = array<i32>} : memref<160x384xf32, #tpu.memory_space<vmem>>, vector<3x384xf32>,
    %25 = vector.extract_strided_slice %2 {offsets = [0, 26], sizes = [3, 384], strides = [1, 1]} : vector<3x640xf32> to vector<3x384xf32>
    %c33 = arith.constant 33 : index
    %c0_14 = arith.constant 0 : index
    %26 = vector.load %arg7[%c33, %c0_14] : memref<160x384xf32, #tpu.memory_space<vmem>>, vector<3x384xf32>
    tpu.vector_store %arg7[%c33, %c0_14], %25 {strides = array<i32>} : memref<160x384xf32, #tpu.memory_space<vmem>>, vector<3x384xf32>,
    %27 = vector.extract_strided_slice %2 {offsets = [0, 27], sizes = [3, 384], strides = [1, 1]} : vector<3x640xf32> to vector<3x384xf32>
    %c36 = arith.constant 36 : index
    %c0_15 = arith.constant 0 : index
    %28 = vector.load %arg7[%c36, %c0_15] : memref<160x384xf32, #tpu.memory_space<vmem>>, vector<3x384xf32>
    tpu.vector_store %arg7[%c36, %c0_15], %27 {strides = array<i32>} : memref<160x384xf32, #tpu.memory_space<vmem>>, vector<3x384xf32>,
    %29 = vector.extract_strided_slice %2 {offsets = [0, 28], sizes = [3, 384], strides = [1, 1]} : vector<3x640xf32> to vector<3x384xf32>
    %c39 = arith.constant 39 : index
    %c0_16 = arith.constant 0 : index
    %30 = vector.load %arg7[%c39, %c0_16] : memref<160x384xf32, #tpu.memory_space<vmem>>, vector<3x384xf32>
    tpu.vector_store %arg7[%c39, %c0_16], %29 {strides = array<i32>} : memref<160x384xf32, #tpu.memory_space<vmem>>, vector<3x384xf32>,
    %31 = vector.extract_strided_slice %2 {offsets = [0, 44], sizes = [3, 384], strides = [1, 1]} : vector<3x640xf32> to vector<3x384xf32>
    %c42 = arith.constant 42 : index
    %c0_17 = arith.constant 0 : index
    %32 = vector.load %arg7[%c42, %c0_17] : memref<160x384xf32, #tpu.memory_space<vmem>>, vector<3x384xf32>
    tpu.vector_store %arg7[%c42, %c0_17], %31 {strides = array<i32>} : memref<160x384xf32, #tpu.memory_space<vmem>>, vector<3x384xf32>,
    %33 = vector.extract_strided_slice %2 {offsets = [0, 45], sizes = [3, 384], strides = [1, 1]} : vector<3x640xf32> to vector<3x384xf32>
    %c45 = arith.constant 45 : index
    %c0_18 = arith.constant 0 : index
    %34 = vector.load %arg7[%c45, %c0_18] : memref<160x384xf32, #tpu.memory_space<vmem>>, vector<3x384xf32>
    tpu.vector_store %arg7[%c45, %c0_18], %33 {strides = array<i32>} : memref<160x384xf32, #tpu.memory_space<vmem>>, vector<3x384xf32>,
    %35 = vector.extract_strided_slice %2 {offsets = [0, 46], sizes = [3, 384], strides = [1, 1]} : vector<3x640xf32> to vector<3x384xf32>
    %c48 = arith.constant 48 : index
    %c0_19 = arith.constant 0 : index
    %36 = vector.load %arg7[%c48, %c0_19] : memref<160x384xf32, #tpu.memory_space<vmem>>, vector<3x384xf32>
    tpu.vector_store %arg7[%c48, %c0_19], %35 {strides = array<i32>} : memref<160x384xf32, #tpu.memory_space<vmem>>, vector<3x384xf32>,
    %37 = vector.extract_strided_slice %2 {offsets = [0, 47], sizes = [3, 384], strides = [1, 1]} : vector<3x640xf32> to vector<3x384xf32>
    %c51 = arith.constant 51 : index
    %c0_20 = arith.constant 0 : index
    %38 = vector.load %arg7[%c51, %c0_20] : memref<160x384xf32, #tpu.memory_space<vmem>>, vector<3x384xf32>
    tpu.vector_store %arg7[%c51, %c0_20], %37 {strides = array<i32>} : memref<160x384xf32, #tpu.memory_space<vmem>>, vector<3x384xf32>,
    %39 = vector.extract_strided_slice %2 {offsets = [0, 48], sizes = [3, 384], strides = [1, 1]} : vector<3x640xf32> to vector<3x384xf32>
    %c54 = arith.constant 54 : index
    %c0_21 = arith.constant 0 : index
    %40 = vector.load %arg7[%c54, %c0_21] : memref<160x384xf32, #tpu.memory_space<vmem>>, vector<3x384xf32>
    tpu.vector_store %arg7[%c54, %c0_21], %39 {strides = array<i32>} : memref<160x384xf32, #tpu.memory_space<vmem>>, vector<3x384xf32>,
    %41 = vector.extract_strided_slice %2 {offsets = [0, 49], sizes = [3, 384], strides = [1, 1]} : vector<3x640xf32> to vector<3x384xf32>
    %c57 = arith.constant 57 : index
    %c0_22 = arith.constant 0 : index
    %42 = vector.load %arg7[%c57, %c0_22] : memref<160x384xf32, #tpu.memory_space<vmem>>, vector<3x384xf32>
    tpu.vector_store %arg7[%c57, %c0_22], %41 {strides = array<i32>} : memref<160x384xf32, #tpu.memory_space<vmem>>, vector<3x384xf32>,
    %43 = vector.extract_strided_slice %2 {offsets = [0, 50], sizes = [3, 384], strides = [1, 1]} : vector<3x640xf32> to vector<3x384xf32>
    %c60 = arith.constant 60 : index
    %c0_23 = arith.constant 0 : index
    %44 = vector.load %arg7[%c60, %c0_23] : memref<160x384xf32, #tpu.memory_space<vmem>>, vector<3x384xf32>
    tpu.vector_store %arg7[%c60, %c0_23], %43 {strides = array<i32>} : memref<160x384xf32, #tpu.memory_space<vmem>>, vector<3x384xf32>,
    %45 = vector.extract_strided_slice %2 {offsets = [0, 66], sizes = [3, 384], strides = [1, 1]} : vector<3x640xf32> to vector<3x384xf32>
    %c63 = arith.constant 63 : index
    %c0_24 = arith.constant 0 : index
    %46 = vector.load %arg7[%c63, %c0_24] : memref<160x384xf32, #tpu.memory_space<vmem>>, vector<3x384xf32>
    tpu.vector_store %arg7[%c63, %c0_24], %45 {strides = array<i32>} : memref<160x384xf32, #tpu.memory_space<vmem>>, vector<3x384xf32>,
    %47 = vector.extract_strided_slice %2 {offsets = [0, 67], sizes = [3, 384], strides = [1, 1]} : vector<3x640xf32> to vector<3x384xf32>
    %c66 = arith.constant 66 : index
    %c0_25 = arith.constant 0 : index
    %48 = vector.load %arg7[%c66, %c0_25] : memref<160x384xf32, #tpu.memory_space<vmem>>, vector<3x384xf32>
    tpu.vector_store %arg7[%c66, %c0_25], %47 {strides = array<i32>} : memref<160x384xf32, #tpu.memory_space<vmem>>, vector<3x384xf32>,
    %49 = vector.extract_strided_slice %2 {offsets = [0, 68], sizes = [3, 384], strides = [1, 1]} : vector<3x640xf32> to vector<3x384xf32>
    %c69 = arith.constant 69 : index
    %c0_26 = arith.constant 0 : index
    %50 = vector.load %arg7[%c69, %c0_26] : memref<160x384xf32, #tpu.memory_space<vmem>>, vector<3x384xf32>
    tpu.vector_store %arg7[%c69, %c0_26], %49 {strides = array<i32>} : memref<160x384xf32, #tpu.memory_space<vmem>>, vector<3x384xf32>,
    %51 = vector.extract_strided_slice %2 {offsets = [0, 69], sizes = [3, 384], strides = [1, 1]} : vector<3x640xf32> to vector<3x384xf32>
    %c72 = arith.constant 72 : index
    %c0_27 = arith.constant 0 : index
    %52 = vector.load %arg7[%c72, %c0_27] : memref<160x384xf32, #tpu.memory_space<vmem>>, vector<3x384xf32>
    tpu.vector_store %arg7[%c72, %c0_27], %51 {strides = array<i32>} : memref<160x384xf32, #tpu.memory_space<vmem>>, vector<3x384xf32>,
    %53 = vector.extract_strided_slice %2 {offsets = [0, 70], sizes = [3, 384], strides = [1, 1]} : vector<3x640xf32> to vector<3x384xf32>
    %c75 = arith.constant 75 : index
    %c0_28 = arith.constant 0 : index
    %54 = vector.load %arg7[%c75, %c0_28] : memref<160x384xf32, #tpu.memory_space<vmem>>, vector<3x384xf32>
    tpu.vector_store %arg7[%c75, %c0_28], %53 {strides = array<i32>} : memref<160x384xf32, #tpu.memory_space<vmem>>, vector<3x384xf32>,
    %55 = vector.extract_strided_slice %2 {offsets = [0, 71], sizes = [3, 384], strides = [1, 1]} : vector<3x640xf32> to vector<3x384xf32>
    %c78 = arith.constant 78 : index
    %c0_29 = arith.constant 0 : index
    %56 = vector.load %arg7[%c78, %c0_29] : memref<160x384xf32, #tpu.memory_space<vmem>>, vector<3x384xf32>
    tpu.vector_store %arg7[%c78, %c0_29], %55 {strides = array<i32>} : memref<160x384xf32, #tpu.memory_space<vmem>>, vector<3x384xf32>,
    %57 = vector.extract_strided_slice %2 {offsets = [0, 72], sizes = [3, 384], strides = [1, 1]} : vector<3x640xf32> to vector<3x384xf32>
    %c81 = arith.constant 81 : index
    %c0_30 = arith.constant 0 : index
    %58 = vector.load %arg7[%c81, %c0_30] : memref<160x384xf32, #tpu.memory_space<vmem>>, vector<3x384xf32>
    tpu.vector_store %arg7[%c81, %c0_30], %57 {strides = array<i32>} : memref<160x384xf32, #tpu.memory_space<vmem>>, vector<3x384xf32>,
    %59 = vector.extract_strided_slice %2 {offsets = [0, 88], sizes = [3, 384], strides = [1, 1]} : vector<3x640xf32> to vector<3x384xf32>
    %c84 = arith.constant 84 : index
    %c0_31 = arith.constant 0 : index
    %60 = vector.load %arg7[%c84, %c0_31] : memref<160x384xf32, #tpu.memory_space<vmem>>, vector<3x384xf32>
    tpu.vector_store %arg7[%c84, %c0_31], %59 {strides = array<i32>} : memref<160x384xf32, #tpu.memory_space<vmem>>, vector<3x384xf32>,
    %61 = vector.extract_strided_slice %2 {offsets = [0, 89], sizes = [3, 384], strides = [1, 1]} : vector<3x640xf32> to vector<3x384xf32>
    %c87 = arith.constant 87 : index
    %c0_32 = arith.constant 0 : index
    %62 = vector.load %arg7[%c87, %c0_32] : memref<160x384xf32, #tpu.memory_space<vmem>>, vector<3x384xf32>
    tpu.vector_store %arg7[%c87, %c0_32], %61 {strides = array<i32>} : memref<160x384xf32, #tpu.memory_space<vmem>>, vector<3x384xf32>,
    %63 = vector.extract_strided_slice %2 {offsets = [0, 90], sizes = [3, 384], strides = [1, 1]} : vector<3x640xf32> to vector<3x384xf32>
    %c90 = arith.constant 90 : index
    %c0_33 = arith.constant 0 : index
    %64 = vector.load %arg7[%c90, %c0_33] : memref<160x384xf32, #tpu.memory_space<vmem>>, vector<3x384xf32>
    tpu.vector_store %arg7[%c90, %c0_33], %63 {strides = array<i32>} : memref<160x384xf32, #tpu.memory_space<vmem>>, vector<3x384xf32>,
    %65 = vector.extract_strided_slice %2 {offsets = [0, 91], sizes = [3, 384], strides = [1, 1]} : vector<3x640xf32> to vector<3x384xf32>
    %c93 = arith.constant 93 : index
    %c0_34 = arith.constant 0 : index
    %66 = vector.load %arg7[%c93, %c0_34] : memref<160x384xf32, #tpu.memory_space<vmem>>, vector<3x384xf32>
    tpu.vector_store %arg7[%c93, %c0_34], %65 {strides = array<i32>} : memref<160x384xf32, #tpu.memory_space<vmem>>, vector<3x384xf32>,
    %67 = vector.extract_strided_slice %2 {offsets = [0, 92], sizes = [3, 384], strides = [1, 1]} : vector<3x640xf32> to vector<3x384xf32>
    %c96 = arith.constant 96 : index
    %c0_35 = arith.constant 0 : index
    %68 = vector.load %arg7[%c96, %c0_35] : memref<160x384xf32, #tpu.memory_space<vmem>>, vector<3x384xf32>
    tpu.vector_store %arg7[%c96, %c0_35], %67 {strides = array<i32>} : memref<160x384xf32, #tpu.memory_space<vmem>>, vector<3x384xf32>,
    %69 = vector.extract_strided_slice %2 {offsets = [0, 93], sizes = [3, 384], strides = [1, 1]} : vector<3x640xf32> to vector<3x384xf32>
    %c99 = arith.constant 99 : index
    %c0_36 = arith.constant 0 : index
    %70 = vector.load %arg7[%c99, %c0_36] : memref<160x384xf32, #tpu.memory_space<vmem>>, vector<3x384xf32>
    tpu.vector_store %arg7[%c99, %c0_36], %69 {strides = array<i32>} : memref<160x384xf32, #tpu.memory_space<vmem>>, vector<3x384xf32>,
    %71 = vector.extract_strided_slice %2 {offsets = [0, 94], sizes = [3, 384], strides = [1, 1]} : vector<3x640xf32> to vector<3x384xf32>
    %c102 = arith.constant 102 : index
    %c0_37 = arith.constant 0 : index
    %72 = vector.load %arg7[%c102, %c0_37] : memref<160x384xf32, #tpu.memory_space<vmem>>, vector<3x384xf32>
    tpu.vector_store %arg7[%c102, %c0_37], %71 {strides = array<i32>} : memref<160x384xf32, #tpu.memory_space<vmem>>, vector<3x384xf32>,
    %73 = vector.extract_strided_slice %2 {offsets = [0, 110], sizes = [3, 384], strides = [1, 1]} : vector<3x640xf32> to vector<3x384xf32>
    %c105 = arith.constant 105 : index
    %c0_38 = arith.constant 0 : index
    %74 = vector.load %arg7[%c105, %c0_38] : memref<160x384xf32, #tpu.memory_space<vmem>>, vector<3x384xf32>
    tpu.vector_store %arg7[%c105, %c0_38], %73 {strides = array<i32>} : memref<160x384xf32, #tpu.memory_space<vmem>>, vector<3x384xf32>,
    %75 = vector.extract_strided_slice %2 {offsets = [0, 111], sizes = [3, 384], strides = [1, 1]} : vector<3x640xf32> to vector<3x384xf32>
    %c108 = arith.constant 108 : index
    %c0_39 = arith.constant 0 : index
    %76 = vector.load %arg7[%c108, %c0_39] : memref<160x384xf32, #tpu.memory_space<vmem>>, vector<3x384xf32>
    tpu.vector_store %arg7[%c108, %c0_39], %75 {strides = array<i32>} : memref<160x384xf32, #tpu.memory_space<vmem>>, vector<3x384xf32>,
    %77 = vector.extract_strided_slice %2 {offsets = [0, 112], sizes = [3, 384], strides = [1, 1]} : vector<3x640xf32> to vector<3x384xf32>
    %c111 = arith.constant 111 : index
    %c0_40 = arith.constant 0 : index
    %78 = vector.load %arg7[%c111, %c0_40] : memref<160x384xf32, #tpu.memory_space<vmem>>, vector<3x384xf32>
    tpu.vector_store %arg7[%c111, %c0_40], %77 {strides = array<i32>} : memref<160x384xf32, #tpu.memory_space<vmem>>, vector<3x384xf32>,
    %79 = vector.extract_strided_slice %2 {offsets = [0, 113], sizes = [3, 384], strides = [1, 1]} : vector<3x640xf32> to vector<3x384xf32>
    %c114 = arith.constant 114 : index
    %c0_41 = arith.constant 0 : index
    %80 = vector.load %arg7[%c114, %c0_41] : memref<160x384xf32, #tpu.memory_space<vmem>>, vector<3x384xf32>
    tpu.vector_store %arg7[%c114, %c0_41], %79 {strides = array<i32>} : memref<160x384xf32, #tpu.memory_space<vmem>>, vector<3x384xf32>,
    %81 = vector.extract_strided_slice %2 {offsets = [0, 114], sizes = [3, 384], strides = [1, 1]} : vector<3x640xf32> to vector<3x384xf32>
    %c117 = arith.constant 117 : index
    %c0_42 = arith.constant 0 : index
    %82 = vector.load %arg7[%c117, %c0_42] : memref<160x384xf32, #tpu.memory_space<vmem>>, vector<3x384xf32>
    tpu.vector_store %arg7[%c117, %c0_42], %81 {strides = array<i32>} : memref<160x384xf32, #tpu.memory_space<vmem>>, vector<3x384xf32>,
    %83 = vector.extract_strided_slice %2 {offsets = [0, 115], sizes = [3, 384], strides = [1, 1]} : vector<3x640xf32> to vector<3x384xf32>
    %c120 = arith.constant 120 : index
    %c0_43 = arith.constant 0 : index
    %84 = vector.load %arg7[%c120, %c0_43] : memref<160x384xf32, #tpu.memory_space<vmem>>, vector<3x384xf32>
    tpu.vector_store %arg7[%c120, %c0_43], %83 {strides = array<i32>} : memref<160x384xf32, #tpu.memory_space<vmem>>, vector<3x384xf32>,
    %85 = vector.extract_strided_slice %2 {offsets = [0, 116], sizes = [3, 384], strides = [1, 1]} : vector<3x640xf32> to vector<3x384xf32>
    %c123 = arith.constant 123 : index
    %c0_44 = arith.constant 0 : index
    %86 = vector.load %arg7[%c123, %c0_44] : memref<160x384xf32, #tpu.memory_space<vmem>>, vector<3x384xf32>
    tpu.vector_store %arg7[%c123, %c0_44], %85 {strides = array<i32>} : memref<160x384xf32, #tpu.memory_space<vmem>>, vector<3x384xf32>,
    %87 = vector.extract_strided_slice %2 {offsets = [0, 132], sizes = [3, 384], strides = [1, 1]} : vector<3x640xf32> to vector<3x384xf32>
    %c126 = arith.constant 126 : index
    %c0_45 = arith.constant 0 : index
    %88 = vector.load %arg7[%c126, %c0_45] : memref<160x384xf32, #tpu.memory_space<vmem>>, vector<3x384xf32>
    tpu.vector_store %arg7[%c126, %c0_45], %87 {strides = array<i32>} : memref<160x384xf32, #tpu.memory_space<vmem>>, vector<3x384xf32>,
    %89 = vector.extract_strided_slice %2 {offsets = [0, 133], sizes = [3, 384], strides = [1, 1]} : vector<3x640xf32> to vector<3x384xf32>
    %c129 = arith.constant 129 : index
    %c0_46 = arith.constant 0 : index
    %90 = vector.load %arg7[%c129, %c0_46] : memref<160x384xf32, #tpu.memory_space<vmem>>, vector<3x384xf32>
    tpu.vector_store %arg7[%c129, %c0_46], %89 {strides = array<i32>} : memref<160x384xf32, #tpu.memory_space<vmem>>, vector<3x384xf32>,
    %91 = vector.extract_strided_slice %2 {offsets = [0, 134], sizes = [3, 384], strides = [1, 1]} : vector<3x640xf32> to vector<3x384xf32>
    %c132 = arith.constant 132 : index
    %c0_47 = arith.constant 0 : index
    %92 = vector.load %arg7[%c132, %c0_47] : memref<160x384xf32, #tpu.memory_space<vmem>>, vector<3x384xf32>
    tpu.vector_store %arg7[%c132, %c0_47], %91 {strides = array<i32>} : memref<160x384xf32, #tpu.memory_space<vmem>>, vector<3x384xf32>,
    %93 = vector.extract_strided_slice %2 {offsets = [0, 135], sizes = [3, 384], strides = [1, 1]} : vector<3x640xf32> to vector<3x384xf32>
    %c135 = arith.constant 135 : index
    %c0_48 = arith.constant 0 : index
    %94 = vector.load %arg7[%c135, %c0_48] : memref<160x384xf32, #tpu.memory_space<vmem>>, vector<3x384xf32>
    tpu.vector_store %arg7[%c135, %c0_48], %93 {strides = array<i32>} : memref<160x384xf32, #tpu.memory_space<vmem>>, vector<3x384xf32>,
    %95 = vector.extract_strided_slice %2 {offsets = [0, 136], sizes = [3, 384], strides = [1, 1]} : vector<3x640xf32> to vector<3x384xf32>
    %c138 = arith.constant 138 : index
    %c0_49 = arith.constant 0 : index
    %96 = vector.load %arg7[%c138, %c0_49] : memref<160x384xf32, #tpu.memory_space<vmem>>, vector<3x384xf32>
    tpu.vector_store %arg7[%c138, %c0_49], %95 {strides = array<i32>} : memref<160x384xf32, #tpu.memory_space<vmem>>, vector<3x384xf32>,
    %97 = vector.extract_strided_slice %2 {offsets = [0, 137], sizes = [3, 384], strides = [1, 1]} : vector<3x640xf32> to vector<3x384xf32>
    %c141 = arith.constant 141 : index
    %c0_50 = arith.constant 0 : index
    %98 = vector.load %arg7[%c141, %c0_50] : memref<160x384xf32, #tpu.memory_space<vmem>>, vector<3x384xf32>
    tpu.vector_store %arg7[%c141, %c0_50], %97 {strides = array<i32>} : memref<160x384xf32, #tpu.memory_space<vmem>>, vector<3x384xf32>,
    %99 = vector.extract_strided_slice %2 {offsets = [0, 138], sizes = [3, 384], strides = [1, 1]} : vector<3x640xf32> to vector<3x384xf32>
    %c144 = arith.constant 144 : index
    %c0_51 = arith.constant 0 : index
    %100 = vector.load %arg7[%c144, %c0_51] : memref<160x384xf32, #tpu.memory_space<vmem>>, vector<3x384xf32>
    tpu.vector_store %arg7[%c144, %c0_51], %99 {strides = array<i32>} : memref<160x384xf32, #tpu.memory_space<vmem>>, vector<3x384xf32>,
    %cst = arith.constant 0.000000e+00 : f32
    %101 = vector.broadcast %cst : f32 to vector<13x384xf32>
    %c147 = arith.constant 147 : index
    %c0_52 = arith.constant 0 : index
    %102 = vector.load %arg7[%c147, %c0_52] : memref<160x384xf32, #tpu.memory_space<vmem>>, vector<13x384xf32>
    tpu.vector_store %arg7[%c147, %c0_52], %101 {strides = array<i32>} : memref<160x384xf32, #tpu.memory_space<vmem>>, vector<13x384xf32>,
    %c0_53 = arith.constant 0 : index
    %c0_54 = arith.constant 0 : index
    %103 = vector.load %arg2[%c0_53, %c0_54] : memref<64x160xbf16, #tpu.memory_space<vmem>>, vector<64x160xbf16>
    %c0_55 = arith.constant 0 : index
    %c0_56 = arith.constant 0 : index
    %104 = vector.load %arg7[%c0_55, %c0_56] : memref<160x384xf32, #tpu.memory_space<vmem>>, vector<160x384xf32>
    %105 = arith.truncf %104 : vector<160x384xf32> to vector<160x384xbf16>
    %cst_57 = arith.constant dense<0.000000e+00> : vector<64x384xf32>
    %106 = tpu.matmul %103, %105, %cst_57 {dimension_numbers = #tpu.dot_dimension_numbers<[1], [0], [0], [1], [0, 0, 1, 1], [], []>} : vector<64x160xbf16>, vector<160x384xbf16>, vector<64x384xf32> -> vector<64x384xf32>
    %c0_58 = arith.constant 0 : index
    %c0_59 = arith.constant 0 : index
    %107 = vector.load %arg5[%c0_58, %c0_59] : memref<1x384xf32, #tpu.memory_space<vmem>>, vector<1x384xf32>
    %108 = vector.broadcast %107 : vector<1x384xf32> to vector<64x384xf32>
    %109 = arith.mulf %106, %108 : vector<64x384xf32>
    %cst_60 = arith.constant dense<0.000000e+00> : vector<64xf32>
    %110 = vector.multi_reduction <add>, %109, %cst_60 [1] : vector<64x384xf32> to vector<64xf32>
    %111 = vector.shape_cast %110 : vector<64xf32> to vector<64x1xf32>
    %112 = arith.mulf %109, %109 : vector<64x384xf32>
    %cst_61 = arith.constant dense<0.000000e+00> : vector<64xf32>
    %113 = vector.multi_reduction <add>, %112, %cst_61 [1] : vector<64x384xf32> to vector<64xf32>
    %114 = vector.shape_cast %113 : vector<64xf32> to vector<64x1xf32>
    %cst_62 = arith.constant 3.906250e-03 : f32
    %115 = vector.broadcast %cst_62 : f32 to vector<64x1xf32>
    %116 = arith.mulf %111, %115 : vector<64x1xf32>
    %cst_63 = arith.constant 3.906250e-03 : f32
    %117 = vector.broadcast %cst_63 : f32 to vector<64x1xf32>
    %118 = arith.mulf %114, %117 : vector<64x1xf32>
    %119 = arith.mulf %116, %116 : vector<64x1xf32>
    %120 = arith.subf %118, %119 : vector<64x1xf32>
    %cst_64 = arith.constant 0.000000e+00 : f32
    %121 = vector.broadcast %cst_64 : f32 to vector<64x1xf32>
    %122 = arith.maximumf %120, %121 : vector<64x1xf32>
    %cst_65 = arith.constant 9.99999974E-6 : f32
    %123 = vector.broadcast %cst_65 : f32 to vector<64x1xf32>
    %124 = arith.addf %122, %123 : vector<64x1xf32>
    %125 = math.rsqrt %124 : vector<64x1xf32>
    %126 = vector.broadcast %116 : vector<64x1xf32> to vector<64x384xf32>
    %127 = arith.subf %106, %126 : vector<64x384xf32>
    %128 = vector.broadcast %125 : vector<64x1xf32> to vector<64x384xf32>
    %129 = arith.mulf %127, %128 : vector<64x384xf32>
    %c0_66 = arith.constant 0 : index
    %c0_67 = arith.constant 0 : index
    %130 = vector.load %arg3[%c0_66, %c0_67] : memref<8x64xf32, #tpu.memory_space<vmem>>, vector<8x64xf32>
    %cst_68 = arith.constant dense<0.000000e+00> : vector<8x384xf32>
    %131 = tpu.matmul %130, %129, %cst_68 {dimension_numbers = #tpu.dot_dimension_numbers<[1], [0], [0], [1], [0, 0, 1, 1], [], []>} : vector<8x64xf32>, vector<64x384xf32>, vector<8x384xf32> -> vector<8x384xf32>
    %c0_69 = arith.constant 0 : index
    %c0_70 = arith.constant 0 : index
    %132 = vector.load %arg4[%c0_69, %c0_70] : memref<8x1xf32, #tpu.memory_space<vmem>>, vector<8x1xf32>
    %133 = vector.broadcast %132 : vector<8x1xf32> to vector<8x384xf32>
    %134 = arith.addf %131, %133 : vector<8x384xf32>
    %c0_71 = arith.constant 0 : index
    %c0_72 = arith.constant 0 : index
    %c0_73 = arith.constant 0 : index
    %135 = vector.load %arg6[%c0_71, %c0_72, %c0_73] : memref<1x8x384xf32, #tpu.memory_space<vmem>>, vector<1x8x384xf32>
    %136 = vector.shape_cast %135 : vector<1x8x384xf32> to vector<8x384xf32>
    %137 = vector.shape_cast %134 : vector<8x384xf32> to vector<1x8x384xf32>
    tpu.vector_store %arg6[%c0_71, %c0_72, %c0_73], %137 {strides = array<i32>} : memref<1x8x384xf32, #tpu.memory_space<vmem>>, vector<1x8x384xf32>,
    return
  }
  func.func @transform_0(%arg0: i32) -> (i32, i32, i32) {
    %c0_i32 = arith.constant 0 : i32
    %c0_i32_0 = arith.constant 0 : i32
    %c0_i32_1 = arith.constant 0 : i32
    return %arg0, %c0_i32, %c0_i32_0 : i32, i32, i32
  }
  func.func @transform_1(%arg0: i32) -> (i32, i32) {
    %c0_i32 = arith.constant 0 : i32
    %c0_i32_0 = arith.constant 0 : i32
    %c0_i32_1 = arith.constant 0 : i32
    return %c0_i32, %c0_i32_0 : i32, i32
  }
  func.func @transform_2(%arg0: i32) -> (i32, i32) {
    %c0_i32 = arith.constant 0 : i32
    %c0_i32_0 = arith.constant 0 : i32
    %c0_i32_1 = arith.constant 0 : i32
    return %c0_i32, %c0_i32_0 : i32, i32
  }
  func.func @transform_3(%arg0: i32) -> (i32, i32) {
    %c0_i32 = arith.constant 0 : i32
    %c0_i32_0 = arith.constant 0 : i32
    %c0_i32_1 = arith.constant 0 : i32
    return %c0_i32, %c0_i32_0 : i32, i32
  }
  func.func @transform_4(%arg0: i32) -> (i32, i32) {
    %c0_i32 = arith.constant 0 : i32
    %c0_i32_0 = arith.constant 0 : i32
    %c0_i32_1 = arith.constant 0 : i32
    return %c0_i32, %c0_i32_0 : i32, i32
  }
  func.func @transform_5(%arg0: i32) -> (i32, i32, i32) {
    %c0_i32 = arith.constant 0 : i32
    %c0_i32_0 = arith.constant 0 : i32
    %c0_i32_1 = arith.constant 0 : i32
    return %arg0, %c0_i32, %c0_i32_0 : i32, i32, i32
  }
}

</mosaic_0001>

<llo_original>
// kernel: tpu_custom_call.1
$region0: #{tpu_custom_call.1}
  #allocation0 [shape = 'u32[]', space=smem, size = 0x4, offset = 0x4, fixed_abs, tag = 'smem constant byte address 0x4 - core index']
  #allocation1 [shape = 'u32[144,128]{1,0:T(1,128)}', space=vmem, size = 0x12000, scoped, tag = 'internal scratch']
  #allocation2 [shape = 'f32[160,384]{1,0:T(8,128)}', space=vmem, size = 0x3c000, scoped, tag = 'scratch operand']
  %s0 = inlined_call_operand.vmem [shape: bf16[2,3,640], index: 0, kind: input, shape index: {}]
  %s1 = inlined_call_operand.hbm [shape: bf16[64,160], index: 1, kind: input, shape index: {}]
  %s2 = inlined_call_operand.vmem [shape: f32[8,64], index: 2, kind: input, shape index: {}]
  %s3 = inlined_call_operand.vmem [shape: f32[8,1], index: 3, kind: input, shape index: {}]
  %s4 = inlined_call_operand.vmem [shape: f32[1,384], index: 4, kind: input, shape index: {}]
  %s5 = inlined_call_operand.hbm [shape: f32[2,8,384], index: 5, kind: output, shape index: {}]
  %s6 = sld [smem:[#allocation0]]
  $region57: #{tpu_custom_call.1} parent=0
    _
  %s8 = ssub.s32 1, %s6
  %s9 = scalar_select 0, %s8, %s6
  $region1: #{tpu_custom_call.1} parent=0
    #allocation3 [shape = 'u8[32768]{0}', space=vmem, size = 0x8000, scoped, tag = 'input window, operand 1, single buffered']
    #allocation4 [shape = 's32[2]{0}', space=sflag, size = 0x8, scoped, tag = 'scoped memory for tpu_custom_call.1']
    #allocation5 [shape = 's32[2]{0}', space=sflag, size = 0x8, scoped, tag = 'scoped memory for tpu_custom_call.1']
    #allocation6 [shape = 'u8[24576]{0}', space=vmem, size = 0x6000, scoped, tag = 'output window, operand 0']
    %10 = vsyncpa [#allocation4], 0
    %11 = vsyncpa [#allocation5], 0
    %s12 = scalar_lea.sflag [#allocation5], 1
    %13 = vsyncpa %s12, 0
    loop: start=0, step=1, limit=4
    $region2: #{tpu_custom_call.1} parent=1 // loop_pre_header
      _
    $region3: #{tpu_custom_call.1} parent=1 // loop_header
      %s15 = sphi 0, %s19
      %p16 = scmp.ge.s32.totalorder %s15, 4
      %s25 = sphi 0, %s27
      %s28 = sphi 0, %s25
      %s29 = sphi 0, %s28
      %s45 = sphi 0, %s29
      %s49 = sphi 0, %s49
      %s51 = sphi 0, %s49
      %s52 = sphi 0, %s51
      %s66 = sphi 0, %s52
      %s70 = sphi 0, %s70
      %s72 = sphi 0, %s70
      %s73 = sphi 0, %s72
      %s87 = sphi 0, %s73
      %s91 = sphi 0, %s91
      %s93 = sphi 0, %s91
      %s94 = sphi 0, %s93
      %s108 = sphi 0, %s94
      %s112 = sphi 0, %s112
      %s114 = sphi 0, %s112
      %s115 = sphi 0, %s114
      %s129 = sphi 0, %s115
      %s135 = sphi 0, %s137
      %s138 = sphi 0, %s135
      %s139 = sphi 0, %s138
      %s155 = sphi 0, %s139
    $region4: #{tpu_custom_call.1} parent=1 // loop_header_branch
      %18 = sbr.rel (%p16) target = $region8
    $region5: #{tpu_custom_call.1} parent=1 // loop_body
      %s20 = ssub.s32 %s15, 1
      %s21 = ssub.s32 %s15, 2
      %s22 = sadd.s32 %s15, 1
      %s23 = ssub.s32 %s15, %s22
      %p24 = scmp.eq.s32.totalorder %s23, 0
      %s26 = sadd.s32 %s25, 1
      %s27 = scalar_select %p24, %s25, %s26
      %p30 = pneg %p24
      %p31 = scmp.eq.s32.totalorder %s15, 1
      %p32 = por %p30, %p31
      %p33 = scmp.ne.s32.totalorder %s25, %s28
      %p34 = scmp.eq.s32.totalorder %s15, 0
      %p35 = por %p33, %p34
      %p36 = scmp.ne.s32.totalorder %s25, %s28
      %p37 = scmp.eq.s32.totalorder %s20, 1
      %p38 = por %p36, %p37
      %p39 = scmp.ne.s32.totalorder %s28, %s29
      %p40 = scmp.eq.s32.totalorder %s20, 0
      %p41 = por %p39, %p40
      %p42 = scmp.ne.s32.totalorder %s28, %s29
      %p43 = scmp.eq.s32.totalorder %s21, 1
      %p44 = por %p42, %p43
      %p46 = scmp.ne.s32.totalorder %s29, %s45
      %p47 = scmp.eq.s32.totalorder %s21, 0
      %p48 = por %p46, %p47
      %s50 = sadd.s32 %s49, 1
      %p53 = scmp.eq.s32.totalorder %s15, 1
      %p54 = scmp.ne.s32.totalorder %s49, %s51
      %p55 = scmp.eq.s32.totalorder %s15, 0
      %p56 = por %p54, %p55
      %p57 = scmp.ne.s32.totalorder %s49, %s51
      %p58 = scmp.eq.s32.totalorder %s20, 1
      %p59 = por %p57, %p58
      %p60 = scmp.ne.s32.totalorder %s51, %s52
      %p61 = scmp.eq.s32.totalorder %s20, 0
      %p62 = por %p60, %p61
      %p63 = scmp.ne.s32.totalorder %s51, %s52
      %p64 = scmp.eq.s32.totalorder %s21, 1
      %p65 = por %p63, %p64
      %p67 = scmp.ne.s32.totalorder %s52, %s66
      %p68 = scmp.eq.s32.totalorder %s21, 0
      %p69 = por %p67, %p68
      %s71 = sadd.s32 %s70, 1
      %p74 = scmp.eq.s32.totalorder %s15, 1
      %p75 = scmp.ne.s32.totalorder %s70, %s72
      %p76 = scmp.eq.s32.totalorder %s15, 0
      %p77 = por %p75, %p76
      %p78 = scmp.ne.s32.totalorder %s70, %s72
      %p79 = scmp.eq.s32.totalorder %s20, 1
      %p80 = por %p78, %p79
      %p81 = scmp.ne.s32.totalorder %s72, %s73
      %p82 = scmp.eq.s32.totalorder %s20, 0
      %p83 = por %p81, %p82
      %p84 = scmp.ne.s32.totalorder %s72, %s73
      %p85 = scmp.eq.s32.totalorder %s21, 1
      %p86 = por %p84, %p85
      %p88 = scmp.ne.s32.totalorder %s73, %s87
      %p89 = scmp.eq.s32.totalorder %s21, 0
      %p90 = por %p88, %p89
      %s92 = sadd.s32 %s91, 1
      %p95 = scmp.eq.s32.totalorder %s15, 1
      %p96 = scmp.ne.s32.totalorder %s91, %s93
      %p97 = scmp.eq.s32.totalorder %s15, 0
      %p98 = por %p96, %p97
      %p99 = scmp.ne.s32.totalorder %s91, %s93
      %p100 = scmp.eq.s32.totalorder %s20, 1
      %p101 = por %p99, %p100
      %p102 = scmp.ne.s32.totalorder %s93, %s94
      %p103 = scmp.eq.s32.totalorder %s20, 0
      %p104 = por %p102, %p103
      %p105 = scmp.ne.s32.totalorder %s93, %s94
      %p106 = scmp.eq.s32.totalorder %s21, 1
      %p107 = por %p105, %p106
      %p109 = scmp.ne.s32.totalorder %s94, %s108
      %p110 = scmp.eq.s32.totalorder %s21, 0
      %p111 = por %p109, %p110
      %s113 = sadd.s32 %s112, 1
      %p116 = scmp.eq.s32.totalorder %s15, 1
      %p117 = scmp.ne.s32.totalorder %s112, %s114
      %p118 = scmp.eq.s32.totalorder %s15, 0
      %p119 = por %p117, %p118
      %p120 = scmp.ne.s32.totalorder %s112, %s114
      %p121 = scmp.eq.s32.totalorder %s20, 1
      %p122 = por %p120, %p121
      %p123 = scmp.ne.s32.totalorder %s114, %s115
      %p124 = scmp.eq.s32.totalorder %s20, 0
      %p125 = por %p123, %p124
      %p126 = scmp.ne.s32.totalorder %s114, %s115
      %p127 = scmp.eq.s32.totalorder %s21, 1
      %p128 = por %p126, %p127
      %p130 = scmp.ne.s32.totalorder %s115, %s129
      %p131 = scmp.eq.s32.totalorder %s21, 0
      %p132 = por %p130, %p131
      %s133 = ssub.s32 %s15, %s22
      %p134 = scmp.eq.s32.totalorder %s133, 0
      %s136 = sadd.s32 %s135, 1
      %s137 = scalar_select %p134, %s135, %s136
      %p140 = pneg %p134
      %p141 = scmp.eq.s32.totalorder %s15, 1
      %p142 = por %p140, %p141
      %p143 = scmp.ne.s32.totalorder %s135, %s138
      %p144 = scmp.eq.s32.totalorder %s15, 0
      %p145 = por %p143, %p144
      %p146 = scmp.ne.s32.totalorder %s135, %s138
      %p147 = scmp.eq.s32.totalorder %s20, 1
      %p148 = por %p146, %p147
      %p149 = scmp.ne.s32.totalorder %s138, %s139
      %p150 = scmp.eq.s32.totalorder %s20, 0
      %p151 = por %p149, %p150
      %p152 = scmp.ne.s32.totalorder %s138, %s139
      %p153 = scmp.eq.s32.totalorder %s21, 1
      %p154 = por %p152, %p153
      %p156 = scmp.ne.s32.totalorder %s139, %s155
      %p157 = scmp.eq.s32.totalorder %s21, 0
      %p158 = por %p156, %p157
      %p159 = scmp.le.s32.totalorder 1, %s15
      %p160 = scmp.lt.s32.totalorder %s15, 3
      %p161 = pnand %p159, %p160
      %p162 = pneg %p161
      // Predicated region
      $region9: #{tpu_custom_call.1} parent=5 // pred_check
        _
      $region10: #{tpu_custom_call.1} parent=5 // pred_check_branch
        %164 = sbr.rel (%p161) target = $region12
      $region11: #{tpu_custom_call.1} parent=5 // pred_region
        %s165 = ssub.s32 %s15, 1
        // Predicated region
        $region13: #{tpu_custom_call.1} parent=11 // pred_check
          %p166 = pneg %p62
        $region14: #{tpu_custom_call.1} parent=11 // pred_check_branch
          %168 = sbr.rel (%p166) target = $region16
        $region15: #{tpu_custom_call.1} parent=11 // pred_region
          %s170 = ssub.s32 1024, 1024
          %171 = vsyncadd [#allocation4], %s170
          %s172 = sshll.u32 [#allocation3], 4
          %s173 = int_to_ptr.vmem [resolvable:$true] %s172
          %178 = dma.hbm_to_vmem [thread:$0]  %s1, 1024, %s173, [#allocation4], 128, 128, 8
        $region16: #{tpu_custom_call.1} parent=11 // pred_fallthru
          _
        // Predicated region
        $region17: #{tpu_custom_call.1} parent=11 // pred_check
          %p179 = pneg %p83
        $region18: #{tpu_custom_call.1} parent=11 // pred_check_branch
          %181 = sbr.rel (%p179) target = $region20
        $region19: #{tpu_custom_call.1} parent=11 // pred_region
          _
        $region20: #{tpu_custom_call.1} parent=11 // pred_fallthru
          _
        // Predicated region
        $region21: #{tpu_custom_call.1} parent=11 // pred_check
          %p182 = pneg %p104
        $region22: #{tpu_custom_call.1} parent=11 // pred_check_branch
          %184 = sbr.rel (%p182) target = $region24
        $region23: #{tpu_custom_call.1} parent=11 // pred_region
          _
        $region24: #{tpu_custom_call.1} parent=11 // pred_fallthru
          _
        // Predicated region
        $region25: #{tpu_custom_call.1} parent=11 // pred_check
          %p185 = pneg %p125
        $region26: #{tpu_custom_call.1} parent=11 // pred_check_branch
          %187 = sbr.rel (%p185) target = $region28
        $region27: #{tpu_custom_call.1} parent=11 // pred_region
          _
        $region28: #{tpu_custom_call.1} parent=11 // pred_fallthru
          _
      $region12: #{tpu_custom_call.1} parent=5 // pred_fallthru
        _
      %p188 = scmp.lt.s32.totalorder %s15, 2
      // Predicated region
      $region29: #{tpu_custom_call.1} parent=5 // pred_check
        %p189 = pneg %p188
      $region30: #{tpu_custom_call.1} parent=5 // pred_check_branch
        %191 = sbr.rel (%p189) target = $region32
      $region31: #{tpu_custom_call.1} parent=5 // pred_region
        // Predicated region
        $region33: #{tpu_custom_call.1} parent=31 // pred_check
          %p192 = pneg %p35
        $region34: #{tpu_custom_call.1} parent=31 // pred_check_branch
          %194 = sbr.rel (%p192) target = $region36
        $region35: #{tpu_custom_call.1} parent=31 // pred_region
          %p195 = scmp.lt.s32.totalorder %s15, 1
          %s196 = scalar_select %p195, %s15, 1
          %s197 = smul.addr %s196, 5
          %s198 = smul.addr %s197, 2
          %s199 = scalar_lea.vmem %s0, %s198
        $region36: #{tpu_custom_call.1} parent=31 // pred_fallthru
          _
      $region32: #{tpu_custom_call.1} parent=5 // pred_fallthru
        _
      %p200 = scmp.le.s32.totalorder 1, %s15
      %p201 = scmp.lt.s32.totalorder %s15, 3
      %p202 = pnand %p200, %p201
      %p203 = pneg %p202
      // Predicated region
      $region37: #{tpu_custom_call.1} parent=5 // pred_check
        _
      $region38: #{tpu_custom_call.1} parent=5 // pred_check_branch
        %205 = sbr.rel (%p202) target = $region40
      $region39: #{tpu_custom_call.1} parent=5 // pred_region
        %s206 = ssub.s32 %s15, 1
        // Predicated region
        $region41: #{tpu_custom_call.1} parent=39 // pred_check
          %p207 = pneg %p62
        $region42: #{tpu_custom_call.1} parent=39 // pred_check_branch
          %209 = sbr.rel (%p207) target = $region44
        $region43: #{tpu_custom_call.1} parent=39 // pred_region
          %210 = dma.done [#allocation4], 1024
        $region44: #{tpu_custom_call.1} parent=39 // pred_fallthru
          _
        %p211 = scmp.lt.s32.totalorder %s20, 1
        %s212 = scalar_select %p211, %s20, 1
        %s213 = smul.addr %s212, 5
        %s214 = smul.addr %s213, 2
        %s215 = scalar_lea.vmem %s0, %s214
        %p216 = pneg %p41
        %p217 = pneg %p38
        %p218 = pneg %p62
        %p219 = pneg %p59
        %p220 = pneg %p83
        %p221 = pneg %p80
        %p222 = pneg %p104
        %p223 = pneg %p101
        %p224 = pneg %p125
        %p225 = pneg %p122
        %p226 = pneg %p151
        %p227 = pneg %p148
        %s228 = sand.u32 %s138, 1
        %s229 = scalar_lea.sflag [#allocation5], %s228
        %s230 = sand.u32 %s138, 1
        %s231 = smul.addr %s230, 24
        %s232 = scalar_lea.vmem [#allocation6], %s231
        %p233 = scmp.lt.s32.totalorder %s20, 1
        %s234 = scalar_select %p233, %s20, 1
        %s235 = smul.addr %s234, 5
        %s236 = smul.addr %s235, 2
        %s237 = scalar_lea.vmem %s0, %s236
        %v239 = vld [vmem:[%s237] sm:$0xff]
        %v240 = vld [vmem:[%s237 + $0x8] sm:$0x3]
        %v241 = vunpack.c.l.bf16 %v239
        %v242 = vunpack.c.h.bf16 %v239
        %v243 = vunpack.c.l.bf16 %v240
        %v246 = vcombine.high %v241, %v241
        %248 = vst [vmem:[#allocation2] sm:$0x7] %v241
        %249 = vst [vmem:[#allocation2 + $0x8] sm:$0x7] %v246
        %250 = vst [vmem:[#allocation2 + $0x10] sm:$0x7] %v242
        %v251 = vcombine.high %v242, %v242
        %v252 = vrot.slane %v241, 5
        %v253 = vrot.slane %v246, 5
        %v254 = vrot.slane %v242, 5
        %v255 = vrot.slane %v251, 5
        %256 = vrot.lane.b32.xlu0 %v252, 127
        %v257 = vpop.permute.xlu0 %256
        %258 = vrot.lane.b32.xlu0 %v253, 127
        %v259 = vpop.permute.xlu0 %258
        %260 = vrot.lane.b32.xlu0 %v254, 127
        %v261 = vpop.permute.xlu0 %260
        %262 = vrot.lane.b32.xlu0 %v255, 127
        %v263 = vpop.permute.xlu0 %262
        %vm264 = vcmask 1039360
        %v265 = vsel %vm264, %v257, %v259
        %v266 = vsel %vm264, %v259, %v261
        %v267 = vsel %vm264, %v261, %v263
        %271 = vst [vmem:[#allocation2] sm:$0x38] %v265
        %272 = vst [vmem:[#allocation2 + $0x8] sm:$0x38] %v266
        %273 = vst [vmem:[#allocation2 + $0x10] sm:$0x38] %v267
        %v274 = vrot.slane %v241, 2
        %v275 = vrot.slane %v246, 2
        %v276 = vrot.slane %v242, 2
        %v277 = vrot.slane %v251, 2
        %278 = vrot.lane.b32.xlu0 %v274, 126
        %v279 = vpop.permute.xlu0 %278
        %280 = vrot.lane.b32.xlu0 %v275, 126
        %v281 = vpop.permute.xlu0 %280
        %282 = vrot.lane.b32.xlu0 %v276, 126
        %v283 = vpop.permute.xlu0 %282
        %284 = vrot.lane.b32.xlu0 %v277, 126
        %v285 = vpop.permute.xlu0 %284
        %vm286 = vcmask 1031168
        %v287 = vsel %vm286, %v279, %v281
        %v288 = vsel %vm286, %v281, %v283
        %v289 = vsel %vm286, %v283, %v285
        %293 = vst [vmem:[#allocation2] sm:$0xc0] %v287
        %294 = vst [vmem:[#allocation2 + $0x8] sm:$0xc0] %v288
        %295 = vst [vmem:[#allocation2 + $0x10] sm:$0xc0] %v289
        %296 = vst [vmem:[#allocation2 + $0x18] sm:$0x1] %v287
        %297 = vst [vmem:[#allocation2 + $0x20] sm:$0x1] %v288
        %298 = vst [vmem:[#allocation2 + $0x28] sm:$0x1] %v289
        %v299 = vrot.slane %v241, 7
        %v300 = vrot.slane %v246, 7
        %v301 = vrot.slane %v242, 7
        %v302 = vrot.slane %v251, 7
        %303 = vrot.lane.b32.xlu0 %v299, 125
        %v304 = vpop.permute.xlu0 %303
        %305 = vrot.lane.b32.xlu0 %v300, 125
        %v306 = vpop.permute.xlu0 %305
        %307 = vrot.lane.b32.xlu0 %v301, 125
        %v308 = vpop.permute.xlu0 %307
        %309 = vrot.lane.b32.xlu0 %v302, 125
        %v310 = vpop.permute.xlu0 %309
        %vm311 = vcmask 1022976
        %v312 = vsel %vm311, %v304, %v306
        %v313 = vsel %vm311, %v306, %v308
        %v314 = vsel %vm311, %v308, %v310
        %318 = vst [vmem:[#allocation2 + $0x18] sm:$0xe] %v312
        %319 = vst [vmem:[#allocation2 + $0x20] sm:$0xe] %v313
        %320 = vst [vmem:[#allocation2 + $0x28] sm:$0xe] %v314
        %v321 = vcombine.low %v241, %v241
        %v322 = vcombine.low %v242, %v242
        %323 = vrot.lane.b32.xlu0 %v321, 124
        %v324 = vpop.permute.xlu0 %323
        %325 = vrot.lane.b32.xlu0 %v241, 124
        %v326 = vpop.permute.xlu0 %325
        %327 = vrot.lane.b32.xlu0 %v322, 124
        %v328 = vpop.permute.xlu0 %327
        %329 = vrot.lane.b32.xlu0 %v242, 124
        %v330 = vpop.permute.xlu0 %329
        %vm331 = vcmask 1014784
        %v332 = vsel %vm331, %v324, %v326
        %v333 = vsel %vm331, %v326, %v328
        %v334 = vsel %vm331, %v328, %v330
        %338 = vst [vmem:[#allocation2 + $0x18] sm:$0x70] %v332
        %339 = vst [vmem:[#allocation2 + $0x20] sm:$0x70] %v333
        %340 = vst [vmem:[#allocation2 + $0x28] sm:$0x70] %v334
        %v341 = vrot.slane %v241, 1
        %v342 = vrot.slane %v246, 1
        %v343 = vrot.slane %v242, 1
        %v344 = vrot.slane %v251, 1
        %345 = vrot.lane.b32.xlu0 %v341, 123
        %v346 = vpop.permute.xlu0 %345
        %347 = vrot.lane.b32.xlu0 %v342, 123
        %v348 = vpop.permute.xlu0 %347
        %349 = vrot.lane.b32.xlu0 %v343, 123
        %v350 = vpop.permute.xlu0 %349
        %351 = vrot.lane.b32.xlu0 %v344, 123
        %v352 = vpop.permute.xlu0 %351
        %vm353 = vcmask 1006592
        %v354 = vsel %vm353, %v346, %v348
        %v355 = vsel %vm353, %v348, %v350
        %v356 = vsel %vm353, %v350, %v352
        %360 = vst [vmem:[#allocation2 + $0x18] sm:$0x80] %v354
        %361 = vst [vmem:[#allocation2 + $0x20] sm:$0x80] %v355
        %362 = vst [vmem:[#allocation2 + $0x28] sm:$0x80] %v356
        %363 = vst [vmem:[#allocation2 + $0x30] sm:$0x3] %v354
        %364 = vst [vmem:[#allocation2 + $0x38] sm:$0x3] %v355
        %365 = vst [vmem:[#allocation2 + $0x40] sm:$0x3] %v356
        %v366 = vrot.slane %v241, 6
        %v367 = vrot.slane %v246, 6
        %v368 = vrot.slane %v242, 6
        %v369 = vrot.slane %v251, 6
        %370 = vrot.lane.b32.xlu0 %v366, 122
        %v371 = vpop.permute.xlu0 %370
        %372 = vrot.lane.b32.xlu0 %v367, 122
        %v373 = vpop.permute.xlu0 %372
        %374 = vrot.lane.b32.xlu0 %v368, 122
        %v375 = vpop.permute.xlu0 %374
        %376 = vrot.lane.b32.xlu0 %v369, 122
        %v377 = vpop.permute.xlu0 %376
        %vm378 = vcmask 998400
        %v379 = vsel %vm378, %v371, %v373
        %v380 = vsel %vm378, %v373, %v375
        %v381 = vsel %vm378, %v375, %v377
        %385 = vst [vmem:[#allocation2 + $0x30] sm:$0x1c] %v379
        %386 = vst [vmem:[#allocation2 + $0x38] sm:$0x1c] %v380
        %387 = vst [vmem:[#allocation2 + $0x40] sm:$0x1c] %v381
        %v388 = vrot.slane %v241, 3
        %v389 = vrot.slane %v246, 3
        %v390 = vrot.slane %v242, 3
        %v391 = vrot.slane %v251, 3
        %392 = vrot.lane.b32.xlu0 %v388, 106
        %v393 = vpop.permute.xlu0 %392
        %394 = vrot.lane.b32.xlu0 %v389, 106
        %v395 = vpop.permute.xlu0 %394
        %396 = vrot.lane.b32.xlu0 %v390, 106
        %v397 = vpop.permute.xlu0 %396
        %398 = vrot.lane.b32.xlu0 %v391, 106
        %v399 = vpop.permute.xlu0 %398
        %vm400 = vcmask 867328
        %v401 = vsel %vm400, %v393, %v395
        %v402 = vsel %vm400, %v395, %v397
        %v403 = vsel %vm400, %v397, %v399
        %407 = vst [vmem:[#allocation2 + $0x30] sm:$0xe0] %v401
        %408 = vst [vmem:[#allocation2 + $0x38] sm:$0xe0] %v402
        %409 = vst [vmem:[#allocation2 + $0x40] sm:$0xe0] %v403
        %410 = vrot.lane.b32.xlu0 %v241, 105
        %v411 = vpop.permute.xlu0 %410
        %412 = vrot.lane.b32.xlu0 %v246, 105
        %v413 = vpop.permute.xlu0 %412
        %414 = vrot.lane.b32.xlu0 %v242, 105
        %v415 = vpop.permute.xlu0 %414
        %416 = vrot.lane.b32.xlu0 %v251, 105
        %v417 = vpop.permute.xlu0 %416
        %vm418 = vcmask 859136
        %v419 = vsel %vm418, %v411, %v413
        %v420 = vsel %vm418, %v413, %v415
        %v421 = vsel %vm418, %v415, %v417
        %425 = vst [vmem:[#allocation2 + $0x48] sm:$0x7] %v419
        %426 = vst [vmem:[#allocation2 + $0x50] sm:$0x7] %v420
        %427 = vst [vmem:[#allocation2 + $0x58] sm:$0x7] %v421
        %428 = vrot.lane.b32.xlu0 %v252, 104
        %v429 = vpop.permute.xlu0 %428
        %430 = vrot.lane.b32.xlu0 %v253, 104
        %v431 = vpop.permute.xlu0 %430
        %432 = vrot.lane.b32.xlu0 %v254, 104
        %v433 = vpop.permute.xlu0 %432
        %434 = vrot.lane.b32.xlu0 %v255, 104
        %v435 = vpop.permute.xlu0 %434
        %vm436 = vcmask 850944
        %v437 = vsel %vm436, %v429, %v431
        %v438 = vsel %vm436, %v431, %v433
        %v439 = vsel %vm436, %v433, %v435
        %443 = vst [vmem:[#allocation2 + $0x48] sm:$0x38] %v437
        %444 = vst [vmem:[#allocation2 + $0x50] sm:$0x38] %v438
        %445 = vst [vmem:[#allocation2 + $0x58] sm:$0x38] %v439
        %446 = vrot.lane.b32.xlu0 %v274, 103
        %v447 = vpop.permute.xlu0 %446
        %448 = vrot.lane.b32.xlu0 %v275, 103
        %v449 = vpop.permute.xlu0 %448
        %450 = vrot.lane.b32.xlu0 %v276, 103
        %v451 = vpop.permute.xlu0 %450
        %452 = vrot.lane.b32.xlu0 %v277, 103
        %v453 = vpop.permute.xlu0 %452
        %vm454 = vcmask 842752
        %v455 = vsel %vm454, %v447, %v449
        %v456 = vsel %vm454, %v449, %v451
        %v457 = vsel %vm454, %v451, %v453
        %461 = vst [vmem:[#allocation2 + $0x48] sm:$0xc0] %v455
        %462 = vst [vmem:[#allocation2 + $0x50] sm:$0xc0] %v456
        %463 = vst [vmem:[#allocation2 + $0x58] sm:$0xc0] %v457
        %464 = vst [vmem:[#allocation2 + $0x60] sm:$0x1] %v455
        %465 = vst [vmem:[#allocation2 + $0x68] sm:$0x1] %v456
        %466 = vst [vmem:[#allocation2 + $0x70] sm:$0x1] %v457
        %467 = vrot.lane.b32.xlu0 %v299, 102
        %v468 = vpop.permute.xlu0 %467
        %469 = vrot.lane.b32.xlu0 %v300, 102
        %v470 = vpop.permute.xlu0 %469
        %471 = vrot.lane.b32.xlu0 %v301, 102
        %v472 = vpop.permute.xlu0 %471
        %473 = vrot.lane.b32.xlu0 %v302, 102
        %v474 = vpop.permute.xlu0 %473
        %vm475 = vcmask 834560
        %v476 = vsel %vm475, %v468, %v470
        %v477 = vsel %vm475, %v470, %v472
        %v478 = vsel %vm475, %v472, %v474
        %482 = vst [vmem:[#allocation2 + $0x60] sm:$0xe] %v476
        %483 = vst [vmem:[#allocation2 + $0x68] sm:$0xe] %v477
        %484 = vst [vmem:[#allocation2 + $0x70] sm:$0xe] %v478
        %485 = vrot.lane.b32.xlu0 %v321, 101
        %v486 = vpop.permute.xlu0 %485
        %487 = vrot.lane.b32.xlu0 %v241, 101
        %v488 = vpop.permute.xlu0 %487
        %489 = vrot.lane.b32.xlu0 %v322, 101
        %v490 = vpop.permute.xlu0 %489
        %491 = vrot.lane.b32.xlu0 %v242, 101
        %v492 = vpop.permute.xlu0 %491
        %vm493 = vcmask 826368
        %v494 = vsel %vm493, %v486, %v488
        %v495 = vsel %vm493, %v488, %v490
        %v496 = vsel %vm493, %v490, %v492
        %500 = vst [vmem:[#allocation2 + $0x60] sm:$0x70] %v494
        %501 = vst [vmem:[#allocation2 + $0x68] sm:$0x70] %v495
        %502 = vst [vmem:[#allocation2 + $0x70] sm:$0x70] %v496
        %503 = vrot.lane.b32.xlu0 %v341, 100
        %v504 = vpop.permute.xlu0 %503
        %505 = vrot.lane.b32.xlu0 %v342, 100
        %v506 = vpop.permute.xlu0 %505
        %507 = vrot.lane.b32.xlu0 %v343, 100
        %v508 = vpop.permute.xlu0 %507
        %509 = vrot.lane.b32.xlu0 %v344, 100
        %v510 = vpop.permute.xlu0 %509
        %vm511 = vcmask 818176
        %v512 = vsel %vm511, %v504, %v506
        %v513 = vsel %vm511, %v506, %v508
        %v514 = vsel %vm511, %v508, %v510
        %518 = vst [vmem:[#allocation2 + $0x60] sm:$0x80] %v512
        %519 = vst [vmem:[#allocation2 + $0x68] sm:$0x80] %v513
        %520 = vst [vmem:[#allocation2 + $0x70] sm:$0x80] %v514
        %521 = vst [vmem:[#allocation2 + $0x78] sm:$0x3] %v512
        %522 = vst [vmem:[#allocation2 + $0x80] sm:$0x3] %v513
        %523 = vst [vmem:[#allocation2 + $0x88] sm:$0x3] %v514
        %524 = vrot.lane.b32.xlu0 %v366, 84
        %v525 = vpop.permute.xlu0 %524
        %526 = vrot.lane.b32.xlu0 %v367, 84
        %v527 = vpop.permute.xlu0 %526
        %528 = vrot.lane.b32.xlu0 %v368, 84
        %v529 = vpop.permute.xlu0 %528
        %530 = vrot.lane.b32.xlu0 %v369, 84
        %v531 = vpop.permute.xlu0 %530
        %vm532 = vcmask 687104
        %v533 = vsel %vm532, %v525, %v527
        %v534 = vsel %vm532, %v527, %v529
        %v535 = vsel %vm532, %v529, %v531
        %539 = vst [vmem:[#allocation2 + $0x78] sm:$0x1c] %v533
        %540 = vst [vmem:[#allocation2 + $0x80] sm:$0x1c] %v534
        %541 = vst [vmem:[#allocation2 + $0x88] sm:$0x1c] %v535
        %542 = vrot.lane.b32.xlu0 %v388, 83
        %v543 = vpop.permute.xlu0 %542
        %544 = vrot.lane.b32.xlu0 %v389, 83
        %v545 = vpop.permute.xlu0 %544
        %546 = vrot.lane.b32.xlu0 %v390, 83
        %v547 = vpop.permute.xlu0 %546
        %548 = vrot.lane.b32.xlu0 %v391, 83
        %v549 = vpop.permute.xlu0 %548
        %vm550 = vcmask 678912
        %v551 = vsel %vm550, %v543, %v545
        %v552 = vsel %vm550, %v545, %v547
        %v553 = vsel %vm550, %v547, %v549
        %557 = vst [vmem:[#allocation2 + $0x78] sm:$0xe0] %v551
        %558 = vst [vmem:[#allocation2 + $0x80] sm:$0xe0] %v552
        %559 = vst [vmem:[#allocation2 + $0x88] sm:$0xe0] %v553
        %560 = vrot.lane.b32.xlu0 %v241, 82
        %v561 = vpop.permute.xlu0 %560
        %562 = vrot.lane.b32.xlu0 %v246, 82
        %v563 = vpop.permute.xlu0 %562
        %564 = vrot.lane.b32.xlu0 %v242, 82
        %v565 = vpop.permute.xlu0 %564
        %566 = vrot.lane.b32.xlu0 %v251, 82
        %v567 = vpop.permute.xlu0 %566
        %vm568 = vcmask 670720
        %v569 = vsel %vm568, %v561, %v563
        %v570 = vsel %vm568, %v563, %v565
        %v571 = vsel %vm568, %v565, %v567
        %575 = vst [vmem:[#allocation2 + $0x90] sm:$0x7] %v569
        %576 = vst [vmem:[#allocation2 + $0x98] sm:$0x7] %v570
        %577 = vst [vmem:[#allocation2 + $0xa0] sm:$0x7] %v571
        %578 = vrot.lane.b32.xlu0 %v252, 81
        %v579 = vpop.permute.xlu0 %578
        %580 = vrot.lane.b32.xlu0 %v253, 81
        %v581 = vpop.permute.xlu0 %580
        %582 = vrot.lane.b32.xlu0 %v254, 81
        %v583 = vpop.permute.xlu0 %582
        %584 = vrot.lane.b32.xlu0 %v255, 81
        %v585 = vpop.permute.xlu0 %584
        %vm586 = vcmask 662528
        %v587 = vsel %vm586, %v579, %v581
        %v588 = vsel %vm586, %v581, %v583
        %v589 = vsel %vm586, %v583, %v585
        %593 = vst [vmem:[#allocation2 + $0x90] sm:$0x38] %v587
        %594 = vst [vmem:[#allocation2 + $0x98] sm:$0x38] %v588
        %595 = vst [vmem:[#allocation2 + $0xa0] sm:$0x38] %v589
        %596 = vrot.lane.b32.xlu0 %v274, 80
        %v597 = vpop.permute.xlu0 %596
        %598 = vrot.lane.b32.xlu0 %v275, 80
        %v599 = vpop.permute.xlu0 %598
        %600 = vrot.lane.b32.xlu0 %v276, 80
        %v601 = vpop.permute.xlu0 %600
        %602 = vrot.lane.b32.xlu0 %v277, 80
        %v603 = vpop.permute.xlu0 %602
        %vm604 = vcmask 654336
        %v605 = vsel %vm604, %v597, %v599
        %v606 = vsel %vm604, %v599, %v601
        %v607 = vsel %vm604, %v601, %v603
        %611 = vst [vmem:[#allocation2 + $0x90] sm:$0xc0] %v605
        %612 = vst [vmem:[#allocation2 + $0x98] sm:$0xc0] %v606
        %613 = vst [vmem:[#allocation2 + $0xa0] sm:$0xc0] %v607
        %614 = vst [vmem:[#allocation2 + $0xa8] sm:$0x1] %v605
        %615 = vst [vmem:[#allocation2 + $0xb0] sm:$0x1] %v606
        %616 = vst [vmem:[#allocation2 + $0xb8] sm:$0x1] %v607
        %617 = vrot.lane.b32.xlu0 %v299, 79
        %v618 = vpop.permute.xlu0 %617
        %619 = vrot.lane.b32.xlu0 %v300, 79
        %v620 = vpop.permute.xlu0 %619
        %621 = vrot.lane.b32.xlu0 %v301, 79
        %v622 = vpop.permute.xlu0 %621
        %623 = vrot.lane.b32.xlu0 %v302, 79
        %v624 = vpop.permute.xlu0 %623
        %vm625 = vcmask 646144
        %v626 = vsel %vm625, %v618, %v620
        %v627 = vsel %vm625, %v620, %v622
        %v628 = vsel %vm625, %v622, %v624
        %632 = vst [vmem:[#allocation2 + $0xa8] sm:$0xe] %v626
        %633 = vst [vmem:[#allocation2 + $0xb0] sm:$0xe] %v627
        %634 = vst [vmem:[#allocation2 + $0xb8] sm:$0xe] %v628
        %635 = vrot.lane.b32.xlu0 %v321, 78
        %v636 = vpop.permute.xlu0 %635
        %637 = vrot.lane.b32.xlu0 %v241, 78
        %v638 = vpop.permute.xlu0 %637
        %639 = vrot.lane.b32.xlu0 %v322, 78
        %v640 = vpop.permute.xlu0 %639
        %641 = vrot.lane.b32.xlu0 %v242, 78
        %v642 = vpop.permute.xlu0 %641
        %vm643 = vcmask 637952
        %v644 = vsel %vm643, %v636, %v638
        %v645 = vsel %vm643, %v638, %v640
        %v646 = vsel %vm643, %v640, %v642
        %650 = vst [vmem:[#allocation2 + $0xa8] sm:$0x70] %v644
        %651 = vst [vmem:[#allocation2 + $0xb0] sm:$0x70] %v645
        %652 = vst [vmem:[#allocation2 + $0xb8] sm:$0x70] %v646
        %653 = vrot.lane.b32.xlu0 %v341, 62
        %v654 = vpop.permute.xlu0 %653
        %655 = vrot.lane.b32.xlu0 %v342, 62
        %v656 = vpop.permute.xlu0 %655
        %657 = vrot.lane.b32.xlu0 %v343, 62
        %v658 = vpop.permute.xlu0 %657
        %659 = vrot.lane.b32.xlu0 %v344, 62
        %v660 = vpop.permute.xlu0 %659
        %vm661 = vcmask 506880
        %v662 = vsel %vm661, %v654, %v656
        %v663 = vsel %vm661, %v656, %v658
        %v664 = vsel %vm661, %v658, %v660
        %668 = vst [vmem:[#allocation2 + $0xa8] sm:$0x80] %v662
        %669 = vst [vmem:[#allocation2 + $0xb0] sm:$0x80] %v663
        %670 = vst [vmem:[#allocation2 + $0xb8] sm:$0x80] %v664
        %671 = vst [vmem:[#allocation2 + $0xc0] sm:$0x3] %v662
        %672 = vst [vmem:[#allocation2 + $0xc8] sm:$0x3] %v663
        %673 = vst [vmem:[#allocation2 + $0xd0] sm:$0x3] %v664
        %674 = vrot.lane.b32.xlu0 %v366, 61
        %v675 = vpop.permute.xlu0 %674
        %676 = vrot.lane.b32.xlu0 %v367, 61
        %v677 = vpop.permute.xlu0 %676
        %678 = vrot.lane.b32.xlu0 %v368, 61
        %v679 = vpop.permute.xlu0 %678
        %680 = vrot.lane.b32.xlu0 %v369, 61
        %v681 = vpop.permute.xlu0 %680
        %vm682 = vcmask 498688
        %v683 = vsel %vm682, %v675, %v677
        %v684 = vsel %vm682, %v677, %v679
        %v685 = vsel %vm682, %v679, %v681
        %689 = vst [vmem:[#allocation2 + $0xc0] sm:$0x1c] %v683
        %690 = vst [vmem:[#allocation2 + $0xc8] sm:$0x1c] %v684
        %691 = vst [vmem:[#allocation2 + $0xd0] sm:$0x1c] %v685
        %692 = vrot.lane.b32.xlu0 %v388, 60
        %v693 = vpop.permute.xlu0 %692
        %694 = vrot.lane.b32.xlu0 %v389, 60
        %v695 = vpop.permute.xlu0 %694
        %696 = vrot.lane.b32.xlu0 %v390, 60
        %v697 = vpop.permute.xlu0 %696
        %698 = vrot.lane.b32.xlu0 %v391, 60
        %v699 = vpop.permute.xlu0 %698
        %vm700 = vcmask 490496
        %v701 = vsel %vm700, %v693, %v695
        %v702 = vsel %vm700, %v695, %v697
        %v703 = vsel %vm700, %v697, %v699
        %707 = vst [vmem:[#allocation2 + $0xc0] sm:$0xe0] %v701
        %708 = vst [vmem:[#allocation2 + $0xc8] sm:$0xe0] %v702
        %709 = vst [vmem:[#allocation2 + $0xd0] sm:$0xe0] %v703
        %710 = vrot.lane.b32.xlu0 %v241, 59
        %v711 = vpop.permute.xlu0 %710
        %712 = vrot.lane.b32.xlu0 %v246, 59
        %v713 = vpop.permute.xlu0 %712
        %714 = vrot.lane.b32.xlu0 %v242, 59
        %v715 = vpop.permute.xlu0 %714
        %716 = vrot.lane.b32.xlu0 %v251, 59
        %v717 = vpop.permute.xlu0 %716
        %vm718 = vcmask 482304
        %v719 = vsel %vm718, %v711, %v713
        %v720 = vsel %vm718, %v713, %v715
        %v721 = vsel %vm718, %v715, %v717
        %725 = vst [vmem:[#allocation2 + $0xd8] sm:$0x7] %v719
        %726 = vst [vmem:[#allocation2 + $0xe0] sm:$0x7] %v720
        %727 = vst [vmem:[#allocation2 + $0xe8] sm:$0x7] %v721
        %728 = vrot.lane.b32.xlu0 %v252, 58
        %v729 = vpop.permute.xlu0 %728
        %730 = vrot.lane.b32.xlu0 %v253, 58
        %v731 = vpop.permute.xlu0 %730
        %732 = vrot.lane.b32.xlu0 %v254, 58
        %v733 = vpop.permute.xlu0 %732
        %734 = vrot.lane.b32.xlu0 %v255, 58
        %v735 = vpop.permute.xlu0 %734
        %vm736 = vcmask 474112
        %v737 = vsel %vm736, %v729, %v731
        %v738 = vsel %vm736, %v731, %v733
        %v739 = vsel %vm736, %v733, %v735
        %743 = vst [vmem:[#allocation2 + $0xd8] sm:$0x38] %v737
        %744 = vst [vmem:[#allocation2 + $0xe0] sm:$0x38] %v738
        %745 = vst [vmem:[#allocation2 + $0xe8] sm:$0x38] %v739
        %746 = vrot.lane.b32.xlu0 %v274, 57
        %v747 = vpop.permute.xlu0 %746
        %748 = vrot.lane.b32.xlu0 %v275, 57
        %v749 = vpop.permute.xlu0 %748
        %750 = vrot.lane.b32.xlu0 %v276, 57
        %v751 = vpop.permute.xlu0 %750
        %752 = vrot.lane.b32.xlu0 %v277, 57
        %v753 = vpop.permute.xlu0 %752
        %vm754 = vcmask 465920
        %v755 = vsel %vm754, %v747, %v749
        %v756 = vsel %vm754, %v749, %v751
        %v757 = vsel %vm754, %v751, %v753
        %761 = vst [vmem:[#allocation2 + $0xd8] sm:$0xc0] %v755
        %762 = vst [vmem:[#allocation2 + $0xe0] sm:$0xc0] %v756
        %763 = vst [vmem:[#allocation2 + $0xe8] sm:$0xc0] %v757
        %764 = vst [vmem:[#allocation2 + $0xf0] sm:$0x1] %v755
        %765 = vst [vmem:[#allocation2 + $0xf8] sm:$0x1] %v756
        %766 = vst [vmem:[#allocation2 + $0x100] sm:$0x1] %v757
        %767 = vrot.lane.b32.xlu0 %v299, 56
        %v768 = vpop.permute.xlu0 %767
        %769 = vrot.lane.b32.xlu0 %v300, 56
        %v770 = vpop.permute.xlu0 %769
        %771 = vrot.lane.b32.xlu0 %v301, 56
        %v772 = vpop.permute.xlu0 %771
        %773 = vrot.lane.b32.xlu0 %v302, 56
        %v774 = vpop.permute.xlu0 %773
        %vm775 = vcmask 457728
        %v776 = vsel %vm775, %v768, %v770
        %v777 = vsel %vm775, %v770, %v772
        %v778 = vsel %vm775, %v772, %v774
        %782 = vst [vmem:[#allocation2 + $0xf0] sm:$0xe] %v776
        %783 = vst [vmem:[#allocation2 + $0xf8] sm:$0xe] %v777
        %784 = vst [vmem:[#allocation2 + $0x100] sm:$0xe] %v778
        %785 = vrot.lane.b32.xlu0 %v321, 40
        %v786 = vpop.permute.xlu0 %785
        %787 = vrot.lane.b32.xlu0 %v241, 40
        %v788 = vpop.permute.xlu0 %787
        %789 = vrot.lane.b32.xlu0 %v322, 40
        %v790 = vpop.permute.xlu0 %789
        %791 = vrot.lane.b32.xlu0 %v242, 40
        %v792 = vpop.permute.xlu0 %791
        %vm793 = vcmask 326656
        %v794 = vsel %vm793, %v786, %v788
        %v795 = vsel %vm793, %v788, %v790
        %v796 = vsel %vm793, %v790, %v792
        %800 = vst [vmem:[#allocation2 + $0xf0] sm:$0x70] %v794
        %801 = vst [vmem:[#allocation2 + $0xf8] sm:$0x70] %v795
        %802 = vst [vmem:[#allocation2 + $0x100] sm:$0x70] %v796
        %803 = vrot.lane.b32.xlu0 %v341, 39
        %v804 = vpop.permute.xlu0 %803
        %805 = vrot.lane.b32.xlu0 %v342, 39
        %v806 = vpop.permute.xlu0 %805
        %807 = vrot.lane.b32.xlu0 %v343, 39
        %v808 = vpop.permute.xlu0 %807
        %809 = vrot.lane.b32.xlu0 %v344, 39
        %v810 = vpop.permute.xlu0 %809
        %vm811 = vcmask 318464
        %v812 = vsel %vm811, %v804, %v806
        %v813 = vsel %vm811, %v806, %v808
        %v814 = vsel %vm811, %v808, %v810
        %818 = vst [vmem:[#allocation2 + $0xf0] sm:$0x80] %v812
        %819 = vst [vmem:[#allocation2 + $0xf8] sm:$0x80] %v813
        %820 = vst [vmem:[#allocation2 + $0x100] sm:$0x80] %v814
        %821 = vst [vmem:[#allocation2 + $0x108] sm:$0x3] %v812
        %822 = vst [vmem:[#allocation2 + $0x110] sm:$0x3] %v813
        %823 = vst [vmem:[#allocation2 + $0x118] sm:$0x3] %v814
        %824 = vrot.lane.b32.xlu0 %v366, 38
        %v825 = vpop.permute.xlu0 %824
        %826 = vrot.lane.b32.xlu0 %v367, 38
        %v827 = vpop.permute.xlu0 %826
        %828 = vrot.lane.b32.xlu0 %v368, 38
        %v829 = vpop.permute.xlu0 %828
        %830 = vrot.lane.b32.xlu0 %v369, 38
        %v831 = vpop.permute.xlu0 %830
        %vm832 = vcmask 310272
        %v833 = vsel %vm832, %v825, %v827
        %v834 = vsel %vm832, %v827, %v829
        %v835 = vsel %vm832, %v829, %v831
        %839 = vst [vmem:[#allocation2 + $0x108] sm:$0x1c] %v833
        %840 = vst [vmem:[#allocation2 + $0x110] sm:$0x1c] %v834
        %841 = vst [vmem:[#allocation2 + $0x118] sm:$0x1c] %v835
        %842 = vrot.lane.b32.xlu0 %v388, 37
        %v843 = vpop.permute.xlu0 %842
        %844 = vrot.lane.b32.xlu0 %v389, 37
        %v845 = vpop.permute.xlu0 %844
        %846 = vrot.lane.b32.xlu0 %v390, 37
        %v847 = vpop.permute.xlu0 %846
        %848 = vrot.lane.b32.xlu0 %v391, 37
        %v849 = vpop.permute.xlu0 %848
        %vm850 = vcmask 302080
        %v851 = vsel %vm850, %v843, %v845
        %v852 = vsel %vm850, %v845, %v847
        %v853 = vsel %vm850, %v847, %v849
        %857 = vst [vmem:[#allocation2 + $0x108] sm:$0xe0] %v851
        %858 = vst [vmem:[#allocation2 + $0x110] sm:$0xe0] %v852
        %859 = vst [vmem:[#allocation2 + $0x118] sm:$0xe0] %v853
        %860 = vrot.lane.b32.xlu0 %v241, 36
        %v861 = vpop.permute.xlu0 %860
        %862 = vrot.lane.b32.xlu0 %v246, 36
        %v863 = vpop.permute.xlu0 %862
        %864 = vrot.lane.b32.xlu0 %v242, 36
        %v865 = vpop.permute.xlu0 %864
        %866 = vrot.lane.b32.xlu0 %v251, 36
        %v867 = vpop.permute.xlu0 %866
        %vm868 = vcmask 293888
        %v869 = vsel %vm868, %v861, %v863
        %v870 = vsel %vm868, %v863, %v865
        %v871 = vsel %vm868, %v865, %v867
        %875 = vst [vmem:[#allocation2 + $0x120] sm:$0x7] %v869
        %876 = vst [vmem:[#allocation2 + $0x128] sm:$0x7] %v870
        %877 = vst [vmem:[#allocation2 + $0x130] sm:$0x7] %v871
        %878 = vrot.lane.b32.xlu0 %v252, 35
        %v879 = vpop.permute.xlu0 %878
        %880 = vrot.lane.b32.xlu0 %v253, 35
        %v881 = vpop.permute.xlu0 %880
        %882 = vrot.lane.b32.xlu0 %v254, 35
        %v883 = vpop.permute.xlu0 %882
        %884 = vrot.lane.b32.xlu0 %v255, 35
        %v885 = vpop.permute.xlu0 %884
        %vm886 = vcmask 285696
        %v887 = vsel %vm886, %v879, %v881
        %v888 = vsel %vm886, %v881, %v883
        %v889 = vsel %vm886, %v883, %v885
        %893 = vst [vmem:[#allocation2 + $0x120] sm:$0x38] %v887
        %894 = vst [vmem:[#allocation2 + $0x128] sm:$0x38] %v888
        %895 = vst [vmem:[#allocation2 + $0x130] sm:$0x38] %v889
        %896 = vrot.lane.b32.xlu0 %v274, 34
        %v897 = vpop.permute.xlu0 %896
        %898 = vrot.lane.b32.xlu0 %v275, 34
        %v899 = vpop.permute.xlu0 %898
        %900 = vrot.lane.b32.xlu0 %v276, 34
        %v901 = vpop.permute.xlu0 %900
        %902 = vrot.lane.b32.xlu0 %v277, 34
        %v903 = vpop.permute.xlu0 %902
        %vm904 = vcmask 277504
        %v905 = vsel %vm904, %v897, %v899
        %v906 = vsel %vm904, %v899, %v901
        %v907 = vsel %vm904, %v901, %v903
        %911 = vst [vmem:[#allocation2 + $0x120] sm:$0xc0] %v905
        %912 = vst [vmem:[#allocation2 + $0x128] sm:$0xc0] %v906
        %913 = vst [vmem:[#allocation2 + $0x130] sm:$0xc0] %v907
        %914 = vst [vmem:[#allocation2 + $0x138] sm:$0x1] %v905
        %915 = vst [vmem:[#allocation2 + $0x140] sm:$0x1] %v906
        %916 = vst [vmem:[#allocation2 + $0x148] sm:$0x1] %v907
        %917 = vrot.lane.b32.xlu0 %v299, 18
        %v918 = vpop.permute.xlu0 %917
        %919 = vrot.lane.b32.xlu0 %v300, 18
        %v920 = vpop.permute.xlu0 %919
        %921 = vrot.lane.b32.xlu0 %v301, 18
        %v922 = vpop.permute.xlu0 %921
        %923 = vrot.lane.b32.xlu0 %v302, 18
        %v924 = vpop.permute.xlu0 %923
        %vm925 = vcmask 146432
        %v926 = vsel %vm925, %v918, %v920
        %v927 = vsel %vm925, %v920, %v922
        %v928 = vsel %vm925, %v922, %v924
        %932 = vst [vmem:[#allocation2 + $0x138] sm:$0xe] %v926
        %933 = vst [vmem:[#allocation2 + $0x140] sm:$0xe] %v927
        %934 = vst [vmem:[#allocation2 + $0x148] sm:$0xe] %v928
        %935 = vrot.lane.b32.xlu0 %v321, 17
        %v936 = vpop.permute.xlu0 %935
        %937 = vrot.lane.b32.xlu0 %v241, 17
        %v938 = vpop.permute.xlu0 %937
        %939 = vrot.lane.b32.xlu0 %v322, 17
        %v940 = vpop.permute.xlu0 %939
        %941 = vrot.lane.b32.xlu0 %v242, 17
        %v942 = vpop.permute.xlu0 %941
        %vm943 = vcmask 138240
        %v944 = vsel %vm943, %v936, %v938
        %v945 = vsel %vm943, %v938, %v940
        %v946 = vsel %vm943, %v940, %v942
        %950 = vst [vmem:[#allocation2 + $0x138] sm:$0x70] %v944
        %951 = vst [vmem:[#allocation2 + $0x140] sm:$0x70] %v945
        %952 = vst [vmem:[#allocation2 + $0x148] sm:$0x70] %v946
        %953 = vrot.lane.b32.xlu0 %v341, 16
        %v954 = vpop.permute.xlu0 %953
        %955 = vrot.lane.b32.xlu0 %v342, 16
        %v956 = vpop.permute.xlu0 %955
        %957 = vrot.lane.b32.xlu0 %v343, 16
        %v958 = vpop.permute.xlu0 %957
        %959 = vrot.lane.b32.xlu0 %v344, 16
        %v960 = vpop.permute.xlu0 %959
        %vm961 = vcmask 130048
        %v962 = vsel %vm961, %v954, %v956
        %v963 = vsel %vm961, %v956, %v958
        %v964 = vsel %vm961, %v958, %v960
        %968 = vst [vmem:[#allocation2 + $0x138] sm:$0x80] %v962
        %969 = vst [vmem:[#allocation2 + $0x140] sm:$0x80] %v963
        %970 = vst [vmem:[#allocation2 + $0x148] sm:$0x80] %v964
        %971 = vst [vmem:[#allocation2 + $0x150] sm:$0x3] %v962
        %972 = vst [vmem:[#allocation2 + $0x158] sm:$0x3] %v963
        %973 = vst [vmem:[#allocation2 + $0x160] sm:$0x3] %v964
        %974 = vrot.lane.b32.xlu0 %v366, 15
        %v975 = vpop.permute.xlu0 %974
        %976 = vrot.lane.b32.xlu0 %v367, 15
        %v977 = vpop.permute.xlu0 %976
        %978 = vrot.lane.b32.xlu0 %v368, 15
        %v979 = vpop.permute.xlu0 %978
        %980 = vrot.lane.b32.xlu0 %v369, 15
        %v981 = vpop.permute.xlu0 %980
        %vm982 = vcmask 121856
        %v983 = vsel %vm982, %v975, %v977
        %v984 = vsel %vm982, %v977, %v979
        %v985 = vsel %vm982, %v979, %v981
        %989 = vst [vmem:[#allocation2 + $0x150] sm:$0x1c] %v983
        %990 = vst [vmem:[#allocation2 + $0x158] sm:$0x1c] %v984
        %991 = vst [vmem:[#allocation2 + $0x160] sm:$0x1c] %v985
        %992 = vrot.lane.b32.xlu0 %v388, 14
        %v993 = vpop.permute.xlu0 %992
        %994 = vrot.lane.b32.xlu0 %v389, 14
        %v995 = vpop.permute.xlu0 %994
        %996 = vrot.lane.b32.xlu0 %v390, 14
        %v997 = vpop.permute.xlu0 %996
        %998 = vrot.lane.b32.xlu0 %v391, 14
        %v999 = vpop.permute.xlu0 %998
        %vm1000 = vcmask 113664
        %v1001 = vsel %vm1000, %v993, %v995
        %v1002 = vsel %vm1000, %v995, %v997
        %v1003 = vsel %vm1000, %v997, %v999
        %1007 = vst [vmem:[#allocation2 + $0x150] sm:$0xe0] %v1001
        %1008 = vst [vmem:[#allocation2 + $0x158] sm:$0xe0] %v1002
        %1009 = vst [vmem:[#allocation2 + $0x160] sm:$0xe0] %v1003
        %1010 = vrot.lane.b32.xlu0 %v241, 13
        %v1011 = vpop.permute.xlu0 %1010
        %1012 = vrot.lane.b32.xlu0 %v246, 13
        %v1013 = vpop.permute.xlu0 %1012
        %1014 = vrot.lane.b32.xlu0 %v242, 13
        %v1015 = vpop.permute.xlu0 %1014
        %1016 = vrot.lane.b32.xlu0 %v251, 13
        %v1017 = vpop.permute.xlu0 %1016
        %vm1018 = vcmask 105472
        %v1019 = vsel %vm1018, %v1011, %v1013
        %v1020 = vsel %vm1018, %v1013, %v1015
        %v1021 = vsel %vm1018, %v1015, %v1017
        %1025 = vst [vmem:[#allocation2 + $0x168] sm:$0x7] %v1019
        %1026 = vst [vmem:[#allocation2 + $0x170] sm:$0x7] %v1020
        %1027 = vst [vmem:[#allocation2 + $0x178] sm:$0x7] %v1021
        %1028 = vrot.lane.b32.xlu0 %v252, 12
        %v1029 = vpop.permute.xlu0 %1028
        %1030 = vrot.lane.b32.xlu0 %v253, 12
        %v1031 = vpop.permute.xlu0 %1030
        %1032 = vrot.lane.b32.xlu0 %v254, 12
        %v1033 = vpop.permute.xlu0 %1032
        %1034 = vrot.lane.b32.xlu0 %v255, 12
        %v1035 = vpop.permute.xlu0 %1034
        %vm1036 = vcmask 97280
        %v1037 = vsel %vm1036, %v1029, %v1031
        %v1038 = vsel %vm1036, %v1031, %v1033
        %v1039 = vsel %vm1036, %v1033, %v1035
        %1043 = vst [vmem:[#allocation2 + $0x168] sm:$0x38] %v1037
        %1044 = vst [vmem:[#allocation2 + $0x170] sm:$0x38] %v1038
        %1045 = vst [vmem:[#allocation2 + $0x178] sm:$0x38] %v1039
        %v1047 = vrot.slane %v243, 2
        %1048 = vrot.lane.b32.xlu0 %v275, 124
        %v1049 = vpop.permute.xlu0 %1048
        %1050 = vrot.lane.b32.xlu0 %v276, 124
        %v1051 = vpop.permute.xlu0 %1050
        %1052 = vrot.lane.b32.xlu0 %v277, 124
        %v1053 = vpop.permute.xlu0 %1052
        %1054 = vrot.lane.b32.xlu0 %v1047, 124
        %v1055 = vpop.permute.xlu0 %1054
        %v1056 = vsel %vm331, %v1049, %v1051
        %v1057 = vsel %vm331, %v1051, %v1053
        %v1058 = vsel %vm331, %v1053, %v1055
        %1062 = vst [vmem:[#allocation2 + $0x168] sm:$0xc0] %v1056
        %1063 = vst [vmem:[#allocation2 + $0x170] sm:$0xc0] %v1057
        %1064 = vst [vmem:[#allocation2 + $0x178] sm:$0xc0] %v1058
        %1065 = vst [vmem:[#allocation2 + $0x180] sm:$0x1] %v1056
        %1066 = vst [vmem:[#allocation2 + $0x188] sm:$0x1] %v1057
        %1067 = vst [vmem:[#allocation2 + $0x190] sm:$0x1] %v1058
        %v1068 = vrot.slane %v243, 7
        %1069 = vrot.lane.b32.xlu0 %v300, 123
        %v1070 = vpop.permute.xlu0 %1069
        %1071 = vrot.lane.b32.xlu0 %v301, 123
        %v1072 = vpop.permute.xlu0 %1071
        %1073 = vrot.lane.b32.xlu0 %v302, 123
        %v1074 = vpop.permute.xlu0 %1073
        %1075 = vrot.lane.b32.xlu0 %v1068, 123
        %v1076 = vpop.permute.xlu0 %1075
        %v1077 = vsel %vm353, %v1070, %v1072
        %v1078 = vsel %vm353, %v1072, %v1074
        %v1079 = vsel %vm353, %v1074, %v1076
        %1083 = vst [vmem:[#allocation2 + $0x180] sm:$0xe] %v1077
        %1084 = vst [vmem:[#allocation2 + $0x188] sm:$0xe] %v1078
        %1085 = vst [vmem:[#allocation2 + $0x190] sm:$0xe] %v1079
        %v1086 = vcombine.low %v243, %v243
        %1087 = vrot.lane.b32.xlu0 %v241, 122
        %v1088 = vpop.permute.xlu0 %1087
        %1089 = vrot.lane.b32.xlu0 %v322, 122
        %v1090 = vpop.permute.xlu0 %1089
        %1091 = vrot.lane.b32.xlu0 %v242, 122
        %v1092 = vpop.permute.xlu0 %1091
        %1093 = vrot.lane.b32.xlu0 %v1086, 122
        %v1094 = vpop.permute.xlu0 %1093
        %v1095 = vsel %vm378, %v1088, %v1090
        %v1096 = vsel %vm378, %v1090, %v1092
        %v1097 = vsel %vm378, %v1092, %v1094
        %1101 = vst [vmem:[#allocation2 + $0x180] sm:$0x70] %v1095
        %1102 = vst [vmem:[#allocation2 + $0x188] sm:$0x70] %v1096
        %1103 = vst [vmem:[#allocation2 + $0x190] sm:$0x70] %v1097
        %v1104 = vrot.slane %v243, 1
        %1105 = vrot.lane.b32.xlu0 %v342, 121
        %v1106 = vpop.permute.xlu0 %1105
        %1107 = vrot.lane.b32.xlu0 %v343, 121
        %v1108 = vpop.permute.xlu0 %1107
        %1109 = vrot.lane.b32.xlu0 %v344, 121
        %v1110 = vpop.permute.xlu0 %1109
        %1111 = vrot.lane.b32.xlu0 %v1104, 121
        %v1112 = vpop.permute.xlu0 %1111
        %vm1113 = vcmask 990208
        %v1114 = vsel %vm1113, %v1106, %v1108
        %v1115 = vsel %vm1113, %v1108, %v1110
        %v1116 = vsel %vm1113, %v1110, %v1112
        %1120 = vst [vmem:[#allocation2 + $0x180] sm:$0x80] %v1114
        %1121 = vst [vmem:[#allocation2 + $0x188] sm:$0x80] %v1115
        %1122 = vst [vmem:[#allocation2 + $0x190] sm:$0x80] %v1116
        %1123 = vst [vmem:[#allocation2 + $0x198] sm:$0x3] %v1114
        %1124 = vst [vmem:[#allocation2 + $0x1a0] sm:$0x3] %v1115
        %1125 = vst [vmem:[#allocation2 + $0x1a8] sm:$0x3] %v1116
        %v1126 = vrot.slane %v243, 6
        %1127 = vrot.lane.b32.xlu0 %v367, 120
        %v1128 = vpop.permute.xlu0 %1127
        %1129 = vrot.lane.b32.xlu0 %v368, 120
        %v1130 = vpop.permute.xlu0 %1129
        %1131 = vrot.lane.b32.xlu0 %v369, 120
        %v1132 = vpop.permute.xlu0 %1131
        %1133 = vrot.lane.b32.xlu0 %v1126, 120
        %v1134 = vpop.permute.xlu0 %1133
        %vm1135 = vcmask 982016
        %v1136 = vsel %vm1135, %v1128, %v1130
        %v1137 = vsel %vm1135, %v1130, %v1132
        %v1138 = vsel %vm1135, %v1132, %v1134
        %1142 = vst [vmem:[#allocation2 + $0x198] sm:$0x1c] %v1136
        %1143 = vst [vmem:[#allocation2 + $0x1a0] sm:$0x1c] %v1137
        %1144 = vst [vmem:[#allocation2 + $0x1a8] sm:$0x1c] %v1138
        %v1145 = vrot.slane %v243, 3
        %1146 = vrot.lane.b32.xlu0 %v389, 119
        %v1147 = vpop.permute.xlu0 %1146
        %1148 = vrot.lane.b32.xlu0 %v390, 119
        %v1149 = vpop.permute.xlu0 %1148
        %1150 = vrot.lane.b32.xlu0 %v391, 119
        %v1151 = vpop.permute.xlu0 %1150
        %1152 = vrot.lane.b32.xlu0 %v1145, 119
        %v1153 = vpop.permute.xlu0 %1152
        %vm1154 = vcmask 973824
        %v1155 = vsel %vm1154, %v1147, %v1149
        %v1156 = vsel %vm1154, %v1149, %v1151
        %v1157 = vsel %vm1154, %v1151, %v1153
        %1161 = vst [vmem:[#allocation2 + $0x198] sm:$0xe0] %v1155
        %1162 = vst [vmem:[#allocation2 + $0x1a0] sm:$0xe0] %v1156
        %1163 = vst [vmem:[#allocation2 + $0x1a8] sm:$0xe0] %v1157
        %1164 = vrot.lane.b32.xlu0 %v246, 118
        %v1165 = vpop.permute.xlu0 %1164
        %1166 = vrot.lane.b32.xlu0 %v242, 118
        %v1167 = vpop.permute.xlu0 %1166
        %1168 = vrot.lane.b32.xlu0 %v251, 118
        %v1169 = vpop.permute.xlu0 %1168
        %1170 = vrot.lane.b32.xlu0 %v243, 118
        %v1171 = vpop.permute.xlu0 %1170
        %vm1172 = vcmask 965632
        %v1173 = vsel %vm1172, %v1165, %v1167
        %v1174 = vsel %vm1172, %v1167, %v1169
        %v1175 = vsel %vm1172, %v1169, %v1171
        %1179 = vst [vmem:[#allocation2 + $0x1b0] sm:$0x7] %v1173
        %1180 = vst [vmem:[#allocation2 + $0x1b8] sm:$0x7] %v1174
        %1181 = vst [vmem:[#allocation2 + $0x1c0] sm:$0x7] %v1175
        %1182 = vst [vmem:[#allocation2 + $0x1b0] sm:$0xf8] 0.0
        %1183 = vst [vmem:[#allocation2 + $0x1b8] sm:$0xf8] 0.0
        %1184 = vst [vmem:[#allocation2 + $0x1c0] sm:$0xf8] 0.0
        %1185 = vst [vmem:[#allocation2 + $0x1c8] sm:$0xff] 0.0
        %1186 = vst [vmem:[#allocation2 + $0x1d0] sm:$0xff] 0.0
        %1187 = vst [vmem:[#allocation2 + $0x1d8] sm:$0xff] 0.0
        %v1188 = vld [vmem:[#allocation3] sm:$0xff]
        %v1189 = vld [vmem:[#allocation3 + $0x8] sm:$0xff]
        %v1190 = vld [vmem:[#allocation3 + $0x10] sm:$0xff]
        %v1191 = vld [vmem:[#allocation3 + $0x18] sm:$0xff]
        %v1192 = vld [vmem:[#allocation3 + $0x20] sm:$0xff]
        %v1193 = vld [vmem:[#allocation3 + $0x28] sm:$0xff]
        %v1194 = vld [vmem:[#allocation3 + $0x30] sm:$0xff]
        %v1195 = vld [vmem:[#allocation3 + $0x38] sm:$0xff]
        %v1196 = vld [vmem:[#allocation2] sm:$0xff]
        %v1197 = vld [vmem:[#allocation2 + $0x8] sm:$0xff]
        %v1198 = vld [vmem:[#allocation2 + $0x10] sm:$0xff]
        %v1199 = vld [vmem:[#allocation2 + $0x18] sm:$0xff]
        %v1200 = vld [vmem:[#allocation2 + $0x20] sm:$0xff]
        %v1201 = vld [vmem:[#allocation2 + $0x28] sm:$0xff]
        %v1202 = vld [vmem:[#allocation2 + $0x30] sm:$0xff]
        %v1203 = vld [vmem:[#allocation2 + $0x38] sm:$0xff]
        %v1204 = vld [vmem:[#allocation2 + $0x40] sm:$0xff]
        %v1205 = vld [vmem:[#allocation2 + $0x48] sm:$0xff]
        %v1206 = vld [vmem:[#allocation2 + $0x50] sm:$0xff]
        %v1207 = vld [vmem:[#allocation2 + $0x58] sm:$0xff]
        %v1208 = vld [vmem:[#allocation2 + $0x60] sm:$0xff]
        %v1209 = vld [vmem:[#allocation2 + $0x68] sm:$0xff]
        %v1210 = vld [vmem:[#allocation2 + $0x70] sm:$0xff]
        %v1211 = vld [vmem:[#allocation2 + $0x78] sm:$0xff]
        %v1212 = vld [vmem:[#allocation2 + $0x80] sm:$0xff]
        %v1213 = vld [vmem:[#allocation2 + $0x88] sm:$0xff]
        %v1214 = vld [vmem:[#allocation2 + $0x90] sm:$0xff]
        %v1215 = vld [vmem:[#allocation2 + $0x98] sm:$0xff]
        %v1216 = vld [vmem:[#allocation2 + $0xa0] sm:$0xff]
        %v1217 = vld [vmem:[#allocation2 + $0xa8] sm:$0xff]
        %v1218 = vld [vmem:[#allocation2 + $0xb0] sm:$0xff]
        %v1219 = vld [vmem:[#allocation2 + $0xb8] sm:$0xff]
        %v1220 = vld [vmem:[#allocation2 + $0xc0] sm:$0xff]
        %v1221 = vld [vmem:[#allocation2 + $0xc8] sm:$0xff]
        %v1222 = vld [vmem:[#allocation2 + $0xd0] sm:$0xff]
        %v1223 = vld [vmem:[#allocation2 + $0xd8] sm:$0xff]
        %v1224 = vld [vmem:[#allocation2 + $0xe0] sm:$0xff]
        %v1225 = vld [vmem:[#allocation2 + $0xe8] sm:$0xff]
        %v1226 = vld [vmem:[#allocation2 + $0xf0] sm:$0xff]
        %v1227 = vld [vmem:[#allocation2 + $0xf8] sm:$0xff]
        %v1228 = vld [vmem:[#allocation2 + $0x100] sm:$0xff]
        %v1229 = vld [vmem:[#allocation2 + $0x108] sm:$0xff]
        %v1230 = vld [vmem:[#allocation2 + $0x110] sm:$0xff]
        %v1231 = vld [vmem:[#allocation2 + $0x118] sm:$0xff]
        %v1232 = vld [vmem:[#allocation2 + $0x120] sm:$0xff]
        %v1233 = vld [vmem:[#allocation2 + $0x128] sm:$0xff]
        %v1234 = vld [vmem:[#allocation2 + $0x130] sm:$0xff]
        %v1235 = vld [vmem:[#allocation2 + $0x138] sm:$0xff]
        %v1236 = vld [vmem:[#allocation2 + $0x140] sm:$0xff]
        %v1237 = vld [vmem:[#allocation2 + $0x148] sm:$0xff]
        %v1238 = vld [vmem:[#allocation2 + $0x150] sm:$0xff]
        %v1239 = vld [vmem:[#allocation2 + $0x158] sm:$0xff]
        %v1240 = vld [vmem:[#allocation2 + $0x160] sm:$0xff]
        %v1241 = vld [vmem:[#allocation2 + $0x168] sm:$0xff]
        %v1242 = vld [vmem:[#allocation2 + $0x170] sm:$0xff]
        %v1243 = vld [vmem:[#allocation2 + $0x178] sm:$0xff]
        %v1244 = vld [vmem:[#allocation2 + $0x180] sm:$0xff]
        %v1245 = vld [vmem:[#allocation2 + $0x188] sm:$0xff]
        %v1246 = vld [vmem:[#allocation2 + $0x190] sm:$0xff]
        %v1247 = vld [vmem:[#allocation2 + $0x198] sm:$0xff]
        %v1248 = vld [vmem:[#allocation2 + $0x1a0] sm:$0xff]
        %v1249 = vld [vmem:[#allocation2 + $0x1a8] sm:$0xff]
        %v1250 = vld [vmem:[#allocation2 + $0x1b0] sm:$0xff]
        %v1251 = vld [vmem:[#allocation2 + $0x1b8] sm:$0xff]
        %v1252 = vld [vmem:[#allocation2 + $0x1c0] sm:$0xff]
        %v1253 = vld [vmem:[#allocation2 + $0x1c8] sm:$0xff]
        %v1254 = vld [vmem:[#allocation2 + $0x1d0] sm:$0xff]
        %v1255 = vld [vmem:[#allocation2 + $0x1d8] sm:$0xff]
        %v1256 = vpack.c.bf16 %v1199, %v1196
        %v1257 = vpack.c.bf16 %v1200, %v1197
        %v1258 = vpack.c.bf16 %v1201, %v1198
        %v1259 = vpack.c.bf16 %v1205, %v1202
        %v1260 = vpack.c.bf16 %v1206, %v1203
        %v1261 = vpack.c.bf16 %v1207, %v1204
        %v1262 = vpack.c.bf16 %v1211, %v1208
        %v1263 = vpack.c.bf16 %v1212, %v1209
        %v1264 = vpack.c.bf16 %v1213, %v1210
        %v1265 = vpack.c.bf16 %v1217, %v1214
        %v1266 = vpack.c.bf16 %v1218, %v1215
        %v1267 = vpack.c.bf16 %v1219, %v1216
        %v1268 = vpack.c.bf16 %v1223, %v1220
        %v1269 = vpack.c.bf16 %v1224, %v1221
        %v1270 = vpack.c.bf16 %v1225, %v1222
        %v1271 = vpack.c.bf16 %v1229, %v1226
        %v1272 = vpack.c.bf16 %v1230, %v1227
        %v1273 = vpack.c.bf16 %v1231, %v1228
        %v1274 = vpack.c.bf16 %v1235, %v1232
        %v1275 = vpack.c.bf16 %v1236, %v1233
        %v1276 = vpack.c.bf16 %v1237, %v1234
        %v1277 = vpack.c.bf16 %v1241, %v1238
        %v1278 = vpack.c.bf16 %v1242, %v1239
        %v1279 = vpack.c.bf16 %v1243, %v1240
        %v1280 = vpack.c.bf16 %v1247, %v1244
        %v1281 = vpack.c.bf16 %v1248, %v1245
        %v1282 = vpack.c.bf16 %v1249, %v1246
        %v1283 = vpack.c.bf16 %v1253, %v1250
        %v1284 = vpack.c.bf16 %v1254, %v1251
        %v1285 = vpack.c.bf16 %v1255, %v1252
        %v1294 = vunpack.c.l.b16 %v1188
        %v1295 = vunpack.c.h.b16 %v1188
        %v1296 = vunpack.c.l.b16 %v1189
        %v1297 = vunpack.c.h.b16 %v1189
        %v1298 = vunpack.c.l.b16 %v1190
        %v1299 = vunpack.c.h.b16 %v1190
        %v1300 = vunpack.c.l.b16 %v1191
        %v1301 = vunpack.c.h.b16 %v1191
        %v1302 = vunpack.c.l.b16 %v1192
        %v1303 = vunpack.c.h.b16 %v1192
        %v1304 = vunpack.c.l.b16 %v1193
        %v1305 = vunpack.c.h.b16 %v1193
        %v1306 = vunpack.c.l.b16 %v1194
        %v1307 = vunpack.c.h.b16 %v1194
        %v1308 = vunpack.c.l.b16 %v1195
        %v1309 = vunpack.c.h.b16 %v1195
        %v1310 = vpack.c.b16 %v1296, %v1294
        %v1311 = vpack.c.b16 %v1297, %v1295
        %v1312 = vpack.c.b16 %v1300, %v1298
        %v1313 = vpack.c.b16 %v1301, %v1299
        %v1314 = vpack.c.b16 %v1304, %v1302
        %v1315 = vpack.c.b16 %v1305, %v1303
        %v1316 = vpack.c.b16 %v1308, %v1306
        %v1317 = vpack.c.b16 %v1309, %v1307
        %vm1322 = vcmask 261120
        %v1324 = vsel %vm1322, %v1311, 0
        %v1327 = vsel %vm1322, %v1313, 0
        %v1330 = vsel %vm1322, %v1315, 0
        %v1333 = vsel %vm1322, %v1317, 0
        %1335 = vmatprep.subr.bf16.mxu0 %v1278
        %1336 = vmatpush1.bf16.msra.mxu0 %v1277
        %1337 = vmatprep.subr.bf16.mxu0 %v1275
        %1338 = vmatpush1.bf16.msra.mxu0 %v1274
        %1339 = vmatprep.subr.bf16.mxu0 %v1272
        %1340 = vmatpush1.bf16.msra.mxu0 %v1271
        %1341 = vmatprep.subr.bf16.mxu0 %v1269
        %1342 = vmatpush1.bf16.msra.mxu0 %v1268
        %1343 = vmatprep.subr.bf16.mxu0 %v1266
        %1344 = vmatpush1.bf16.msra.mxu0 %v1265
        %1345 = vmatprep.subr.bf16.mxu0 %v1263
        %1346 = vmatpush1.bf16.msra.mxu0 %v1262
        %1347 = vmatprep.subr.bf16.mxu0 %v1260
        %1348 = vmatpush1.bf16.msra.mxu0 %v1259
        %1349 = vmatprep.subr.bf16.mxu0 %v1257
        %1350 = vmatpush1.bf16.msra.mxu0 %v1256
        %1351 = vmatprep.subr.bf16.mxu0 0
        %1352 = vmatpush2.bf16.msra.mxu0 0
        %1353 = vmatprep.subr.bf16.mxu0 0
        %1354 = vmatpush2.bf16.msra.mxu0 0
        %1355 = vmatprep.subr.bf16.mxu0 0
        %1356 = vmatpush2.bf16.msra.mxu0 0
        %1357 = vmatprep.subr.bf16.mxu0 0
        %1358 = vmatpush2.bf16.msra.mxu0 0
        %1359 = vmatprep.subr.bf16.mxu0 0
        %1360 = vmatpush2.bf16.msra.mxu0 0
        %1361 = vmatprep.subr.bf16.mxu0 0
        %1362 = vmatpush2.bf16.msra.mxu0 0
        %1363 = vmatprep.subr.bf16.mxu0 %v1284
        %1364 = vmatpush2.bf16.msra.mxu0 %v1283
        %1365 = vmatprep.subr.bf16.mxu0 %v1281
        %1366 = vmatpush2.bf16.msra.mxu0 %v1280
        %1367 = vmatprep.mubr.bf16.mxu0 %v1324
        %1368 = vmatmul.mubr.bf16.gmra.mxu0 %v1310
        %v1369 = vpop.f32.mrf.mxu0
        %v1370 = vadd.f32 0.0, %v1369
        %v1371 = vpop.f32.mrf.mxu0
        %v1372 = vadd.f32 0.0, %v1371
        %v1373 = vpop.f32.mrf.mxu0
        %v1374 = vadd.f32 0.0, %v1373
        %v1375 = vpop.f32.mrf.mxu0
        %v1376 = vadd.f32 0.0, %v1375
        %1377 = vmatprep.mubr.bf16.mxu0 %v1327
        %1378 = vmatmul.mubr.bf16.gmra.mxu0 %v1312
        %v1379 = vpop.f32.mrf.mxu0
        %v1380 = vadd.f32 0.0, %v1379
        %v1381 = vpop.f32.mrf.mxu0
        %v1382 = vadd.f32 0.0, %v1381
        %v1383 = vpop.f32.mrf.mxu0
        %v1384 = vadd.f32 0.0, %v1383
        %v1385 = vpop.f32.mrf.mxu0
        %v1386 = vadd.f32 0.0, %v1385
        %1387 = vmatprep.mubr.bf16.mxu0 %v1330
        %1388 = vmatmul.mubr.bf16.gmra.mxu0 %v1314
        %v1389 = vpop.f32.mrf.mxu0
        %v1390 = vadd.f32 0.0, %v1389
        %v1391 = vpop.f32.mrf.mxu0
        %v1392 = vadd.f32 0.0, %v1391
        %v1393 = vpop.f32.mrf.mxu0
        %v1394 = vadd.f32 0.0, %v1393
        %v1395 = vpop.f32.mrf.mxu0
        %v1396 = vadd.f32 0.0, %v1395
        %1397 = vmatprep.mubr.bf16.mxu0 %v1333
        %1398 = vmatmul.mubr.bf16.gmra.mxu0 %v1316
        %v1399 = vpop.f32.mrf.mxu0
        %v1400 = vadd.f32 0.0, %v1399
        %v1401 = vpop.f32.mrf.mxu0
        %v1402 = vadd.f32 0.0, %v1401
        %v1403 = vpop.f32.mrf.mxu0
        %v1404 = vadd.f32 0.0, %v1403
        %v1405 = vpop.f32.mrf.mxu0
        %v1406 = vadd.f32 0.0, %v1405
        %1407 = vdwg.mxu0
        %1408 = vmatprep.subr.bf16.mxu0 0
        %1409 = vmatpush1.bf16.msra.mxu0 %v1279
        %1410 = vmatprep.subr.bf16.mxu0 0
        %1411 = vmatpush1.bf16.msra.mxu0 %v1276
        %1412 = vmatprep.subr.bf16.mxu0 0
        %1413 = vmatpush1.bf16.msra.mxu0 %v1273
        %1414 = vmatprep.subr.bf16.mxu0 0
        %1415 = vmatpush1.bf16.msra.mxu0 %v1270
        %1416 = vmatprep.subr.bf16.mxu0 0
        %1417 = vmatpush1.bf16.msra.mxu0 %v1267
        %1418 = vmatprep.subr.bf16.mxu0 0
        %1419 = vmatpush1.bf16.msra.mxu0 %v1264
        %1420 = vmatprep.subr.bf16.mxu0 0
        %1421 = vmatpush1.bf16.msra.mxu0 %v1261
        %1422 = vmatprep.subr.bf16.mxu0 0
        %1423 = vmatpush1.bf16.msra.mxu0 %v1258
        %1424 = vmatprep.subr.bf16.mxu0 0
        %1425 = vmatpush2.bf16.msra.mxu0 0
        %1426 = vmatprep.subr.bf16.mxu0 0
        %1427 = vmatpush2.bf16.msra.mxu0 0
        %1428 = vmatprep.subr.bf16.mxu0 0
        %1429 = vmatpush2.bf16.msra.mxu0 0
        %1430 = vmatprep.subr.bf16.mxu0 0
        %1431 = vmatpush2.bf16.msra.mxu0 0
        %1432 = vmatprep.subr.bf16.mxu0 0
        %1433 = vmatpush2.bf16.msra.mxu0 0
        %1434 = vmatprep.subr.bf16.mxu0 0
        %1435 = vmatpush2.bf16.msra.mxu0 0
        %1436 = vmatprep.subr.bf16.mxu0 0
        %1437 = vmatpush2.bf16.msra.mxu0 %v1285
        %1438 = vmatprep.subr.bf16.mxu0 0
        %1439 = vmatpush2.bf16.msra.mxu0 %v1282
        %1440 = vmatprep.mubr.bf16.mxu0 %v1324
        %1441 = vmatmul.mubr.bf16.gmra.mxu0 %v1310
        %v1442 = vpop.f32.mrf.mxu0
        %v1443 = vadd.f32 0.0, %v1442
        %v1444 = vpop.f32.mrf.mxu0
        %v1445 = vpop.f32.mrf.mxu0
        %v1446 = vadd.f32 0.0, %v1445
        %v1447 = vpop.f32.mrf.mxu0
        %1448 = vmatprep.mubr.bf16.mxu0 %v1327
        %1449 = vmatmul.mubr.bf16.gmra.mxu0 %v1312
        %v1450 = vpop.f32.mrf.mxu0
        %v1451 = vadd.f32 0.0, %v1450
        %v1452 = vpop.f32.mrf.mxu0
        %v1453 = vpop.f32.mrf.mxu0
        %v1454 = vadd.f32 0.0, %v1453
        %v1455 = vpop.f32.mrf.mxu0
        %1456 = vmatprep.mubr.bf16.mxu0 %v1330
        %1457 = vmatmul.mubr.bf16.gmra.mxu0 %v1314
        %v1458 = vpop.f32.mrf.mxu0
        %v1459 = vadd.f32 0.0, %v1458
        %v1460 = vpop.f32.mrf.mxu0
        %v1461 = vpop.f32.mrf.mxu0
        %v1462 = vadd.f32 0.0, %v1461
        %v1463 = vpop.f32.mrf.mxu0
        %1464 = vmatprep.mubr.bf16.mxu0 %v1333
        %1465 = vmatmul.mubr.bf16.gmra.mxu0 %v1316
        %v1466 = vpop.f32.mrf.mxu0
        %v1467 = vadd.f32 0.0, %v1466
        %v1468 = vpop.f32.mrf.mxu0
        %v1469 = vpop.f32.mrf.mxu0
        %v1470 = vadd.f32 0.0, %v1469
        %v1471 = vpop.f32.mrf.mxu0
        %1472 = vdwg.mxu0
        %v1473 = vld [vmem:[%s4] sm:$0x7]
        %v1475 = vlaneseq
        %v1476 = vshrl.u32 %v1475, 7
        %v1477 = vsub.s32 0, %v1476
        %v1478 = vrot.slane %v1473, %v1477
        %v1479 = vlaneseq
        %v1480 = vshrl.u32 %v1479, 7
        %v1481 = vsub.s32 1, %v1480
        %v1482 = vrot.slane %v1473, %v1481
        %v1483 = vlaneseq
        %v1484 = vshrl.u32 %v1483, 7
        %v1485 = vsub.s32 2, %v1484
        %v1486 = vrot.slane %v1473, %v1485
        %v1490 = vmul.f32 %v1370, %v1478
        %v1491 = vmul.f32 %v1372, %v1482
        %v1492 = vmul.f32 %v1443, %v1486
        %v1493 = vmul.f32 %v1374, %v1478
        %v1494 = vmul.f32 %v1376, %v1482
        %v1495 = vmul.f32 %v1446, %v1486
        %v1496 = vmul.f32 %v1380, %v1478
        %v1497 = vmul.f32 %v1382, %v1482
        %v1498 = vmul.f32 %v1451, %v1486
        %v1499 = vmul.f32 %v1384, %v1478
        %v1500 = vmul.f32 %v1386, %v1482
        %v1501 = vmul.f32 %v1454, %v1486
        %v1502 = vmul.f32 %v1390, %v1478
        %v1503 = vmul.f32 %v1392, %v1482
        %v1504 = vmul.f32 %v1459, %v1486
        %v1505 = vmul.f32 %v1394, %v1478
        %v1506 = vmul.f32 %v1396, %v1482
        %v1507 = vmul.f32 %v1462, %v1486
        %v1508 = vmul.f32 %v1400, %v1478
        %v1509 = vmul.f32 %v1402, %v1482
        %v1510 = vmul.f32 %v1467, %v1486
        %v1511 = vmul.f32 %v1404, %v1478
        %v1512 = vmul.f32 %v1406, %v1482
        %v1513 = vmul.f32 %v1470, %v1486
        %v1514 = vadd.f32 %v1490, %v1491
        %v1515 = vadd.f32 %v1514, %v1492
        %1516 = vadd.xlane.f32.xlu0 %v1515
        %v1517 = vpop.xlane.xlu0 %1516
        %v1518 = vadd.f32 %v1493, %v1494
        %v1519 = vadd.f32 %v1518, %v1495
        %1520 = vadd.xlane.f32.xlu0 %v1519
        %v1521 = vpop.xlane.xlu0 %1520
        %v1522 = vadd.f32 %v1496, %v1497
        %v1523 = vadd.f32 %v1522, %v1498
        %1524 = vadd.xlane.f32.xlu0 %v1523
        %v1525 = vpop.xlane.xlu0 %1524
        %v1526 = vadd.f32 %v1499, %v1500
        %v1527 = vadd.f32 %v1526, %v1501
        %1528 = vadd.xlane.f32.xlu0 %v1527
        %v1529 = vpop.xlane.xlu0 %1528
        %v1530 = vadd.f32 %v1502, %v1503
        %v1531 = vadd.f32 %v1530, %v1504
        %1532 = vadd.xlane.f32.xlu0 %v1531
        %v1533 = vpop.xlane.xlu0 %1532
        %v1534 = vadd.f32 %v1505, %v1506
        %v1535 = vadd.f32 %v1534, %v1507
        %1536 = vadd.xlane.f32.xlu0 %v1535
        %v1537 = vpop.xlane.xlu0 %1536
        %v1538 = vadd.f32 %v1508, %v1509
        %v1539 = vadd.f32 %v1538, %v1510
        %1540 = vadd.xlane.f32.xlu0 %v1539
        %v1541 = vpop.xlane.xlu0 %1540
        %v1542 = vadd.f32 %v1511, %v1512
        %v1543 = vadd.f32 %v1542, %v1513
        %1544 = vadd.xlane.f32.xlu0 %v1543
        %v1545 = vpop.xlane.xlu0 %1544
        %v1546 = vmul.f32 %v1490, %v1490
        %v1547 = vmul.f32 %v1491, %v1491
        %v1548 = vmul.f32 %v1492, %v1492
        %v1549 = vmul.f32 %v1493, %v1493
        %v1550 = vmul.f32 %v1494, %v1494
        %v1551 = vmul.f32 %v1495, %v1495
        %v1552 = vmul.f32 %v1496, %v1496
        %v1553 = vmul.f32 %v1497, %v1497
        %v1554 = vmul.f32 %v1498, %v1498
        %v1555 = vmul.f32 %v1499, %v1499
        %v1556 = vmul.f32 %v1500, %v1500
        %v1557 = vmul.f32 %v1501, %v1501
        %v1558 = vmul.f32 %v1502, %v1502
        %v1559 = vmul.f32 %v1503, %v1503
        %v1560 = vmul.f32 %v1504, %v1504
        %v1561 = vmul.f32 %v1505, %v1505
        %v1562 = vmul.f32 %v1506, %v1506
        %v1563 = vmul.f32 %v1507, %v1507
        %v1564 = vmul.f32 %v1508, %v1508
        %v1565 = vmul.f32 %v1509, %v1509
        %v1566 = vmul.f32 %v1510, %v1510
        %v1567 = vmul.f32 %v1511, %v1511
        %v1568 = vmul.f32 %v1512, %v1512
        %v1569 = vmul.f32 %v1513, %v1513
        %v1570 = vadd.f32 %v1546, %v1547
        %v1571 = vadd.f32 %v1570, %v1548
        %1572 = vadd.xlane.f32.xlu0 %v1571
        %v1573 = vpop.xlane.xlu0 %1572
        %v1574 = vadd.f32 %v1549, %v1550
        %v1575 = vadd.f32 %v1574, %v1551
        %1576 = vadd.xlane.f32.xlu0 %v1575
        %v1577 = vpop.xlane.xlu0 %1576
        %v1578 = vadd.f32 %v1552, %v1553
        %v1579 = vadd.f32 %v1578, %v1554
        %1580 = vadd.xlane.f32.xlu0 %v1579
        %v1581 = vpop.xlane.xlu0 %1580
        %v1582 = vadd.f32 %v1555, %v1556
        %v1583 = vadd.f32 %v1582, %v1557
        %1584 = vadd.xlane.f32.xlu0 %v1583
        %v1585 = vpop.xlane.xlu0 %1584
        %v1586 = vadd.f32 %v1558, %v1559
        %v1587 = vadd.f32 %v1586, %v1560
        %1588 = vadd.xlane.f32.xlu0 %v1587
        %v1589 = vpop.xlane.xlu0 %1588
        %v1590 = vadd.f32 %v1561, %v1562
        %v1591 = vadd.f32 %v1590, %v1563
        %1592 = vadd.xlane.f32.xlu0 %v1591
        %v1593 = vpop.xlane.xlu0 %1592
        %v1594 = vadd.f32 %v1564, %v1565
        %v1595 = vadd.f32 %v1594, %v1566
        %1596 = vadd.xlane.f32.xlu0 %v1595
        %v1597 = vpop.xlane.xlu0 %1596
        %v1598 = vadd.f32 %v1567, %v1568
        %v1599 = vadd.f32 %v1598, %v1569
        %1600 = vadd.xlane.f32.xlu0 %v1599
        %v1601 = vpop.xlane.xlu0 %1600
        %v1602 = vmul.f32 %v1517, 0.00390625
        %v1603 = vmul.f32 %v1521, 0.00390625
        %v1604 = vmul.f32 %v1525, 0.00390625
        %v1605 = vmul.f32 %v1529, 0.00390625
        %v1606 = vmul.f32 %v1533, 0.00390625
        %v1607 = vmul.f32 %v1537, 0.00390625
        %v1608 = vmul.f32 %v1541, 0.00390625
        %v1609 = vmul.f32 %v1545, 0.00390625
        %v1610 = vmul.f32 %v1573, 0.00390625
        %v1611 = vmul.f32 %v1577, 0.00390625
        %v1612 = vmul.f32 %v1581, 0.00390625
        %v1613 = vmul.f32 %v1585, 0.00390625
        %v1614 = vmul.f32 %v1589, 0.00390625
        %v1615 = vmul.f32 %v1593, 0.00390625
        %v1616 = vmul.f32 %v1597, 0.00390625
        %v1617 = vmul.f32 %v1601, 0.00390625
        %v1618 = vmul.f32 %v1602, %v1602
        %v1619 = vmul.f32 %v1603, %v1603
        %v1620 = vmul.f32 %v1604, %v1604
        %v1621 = vmul.f32 %v1605, %v1605
        %v1622 = vmul.f32 %v1606, %v1606
        %v1623 = vmul.f32 %v1607, %v1607
        %v1624 = vmul.f32 %v1608, %v1608
        %v1625 = vmul.f32 %v1609, %v1609
        %v1626 = vsub.f32 %v1610, %v1618
        %v1627 = vsub.f32 %v1611, %v1619
        %v1628 = vsub.f32 %v1612, %v1620
        %v1629 = vsub.f32 %v1613, %v1621
        %v1630 = vsub.f32 %v1614, %v1622
        %v1631 = vsub.f32 %v1615, %v1623
        %v1632 = vsub.f32 %v1616, %v1624
        %v1633 = vsub.f32 %v1617, %v1625
        %v1634 = vmax.f32 %v1626, 0.0
        %v1635 = vmax.f32 %v1627, 0.0
        %v1636 = vmax.f32 %v1628, 0.0
        %v1637 = vmax.f32 %v1629, 0.0
        %v1638 = vmax.f32 %v1630, 0.0
        %v1639 = vmax.f32 %v1631, 0.0
        %v1640 = vmax.f32 %v1632, 0.0
        %v1641 = vmax.f32 %v1633, 0.0
        %v1642 = vadd.f32 %v1634, 1e-05
        %v1643 = vadd.f32 %v1635, 1e-05
        %v1644 = vadd.f32 %v1636, 1e-05
        %v1645 = vadd.f32 %v1637, 1e-05
        %v1646 = vadd.f32 %v1638, 1e-05
        %v1647 = vadd.f32 %v1639, 1e-05
        %v1648 = vadd.f32 %v1640, 1e-05
        %v1649 = vadd.f32 %v1641, 1e-05
        %v1650 = vrsqrt.pop %v1642
        %v1651 = vrsqrt.pop %v1643
        %v1652 = vrsqrt.pop %v1644
        %v1653 = vrsqrt.pop %v1645
        %v1654 = vrsqrt.pop %v1646
        %v1655 = vrsqrt.pop %v1647
        %v1656 = vrsqrt.pop %v1648
        %v1657 = vrsqrt.pop %v1649
        %v1658 = vsub.f32 %v1370, %v1602
        %v1659 = vsub.f32 %v1372, %v1602
        %v1660 = vsub.f32 %v1443, %v1602
        %v1661 = vsub.f32 %v1374, %v1603
        %v1662 = vsub.f32 %v1376, %v1603
        %v1663 = vsub.f32 %v1446, %v1603
        %v1664 = vsub.f32 %v1380, %v1604
        %v1665 = vsub.f32 %v1382, %v1604
        %v1666 = vsub.f32 %v1451, %v1604
        %v1667 = vsub.f32 %v1384, %v1605
        %v1668 = vsub.f32 %v1386, %v1605
        %v1669 = vsub.f32 %v1454, %v1605
        %v1670 = vsub.f32 %v1390, %v1606
        %v1671 = vsub.f32 %v1392, %v1606
        %v1672 = vsub.f32 %v1459, %v1606
        %v1673 = vsub.f32 %v1394, %v1607
        %v1674 = vsub.f32 %v1396, %v1607
        %v1675 = vsub.f32 %v1462, %v1607
        %v1676 = vsub.f32 %v1400, %v1608
        %v1677 = vsub.f32 %v1402, %v1608
        %v1678 = vsub.f32 %v1467, %v1608
        %v1679 = vsub.f32 %v1404, %v1609
        %v1680 = vsub.f32 %v1406, %v1609
        %v1681 = vsub.f32 %v1470, %v1609
        %v1682 = vmul.f32 %v1658, %v1650
        %v1683 = vmul.f32 %v1659, %v1650
        %v1684 = vmul.f32 %v1660, %v1650
        %v1685 = vmul.f32 %v1661, %v1651
        %v1686 = vmul.f32 %v1662, %v1651
        %v1687 = vmul.f32 %v1663, %v1651
        %v1688 = vmul.f32 %v1664, %v1652
        %v1689 = vmul.f32 %v1665, %v1652
        %v1690 = vmul.f32 %v1666, %v1652
        %v1691 = vmul.f32 %v1667, %v1653
        %v1692 = vmul.f32 %v1668, %v1653
        %v1693 = vmul.f32 %v1669, %v1653
        %v1694 = vmul.f32 %v1670, %v1654
        %v1695 = vmul.f32 %v1671, %v1654
        %v1696 = vmul.f32 %v1672, %v1654
        %v1697 = vmul.f32 %v1673, %v1655
        %v1698 = vmul.f32 %v1674, %v1655
        %v1699 = vmul.f32 %v1675, %v1655
        %v1700 = vmul.f32 %v1676, %v1656
        %v1701 = vmul.f32 %v1677, %v1656
        %v1702 = vmul.f32 %v1678, %v1656
        %v1703 = vmul.f32 %v1679, %v1657
        %v1704 = vmul.f32 %v1680, %v1657
        %v1705 = vmul.f32 %v1681, %v1657
        %v1706 = vld [vmem:[%s2] sm:$0xff]
        %v1707 = vld [vmem:[%s3] sm:$0xff]
        %1709 = vset.pattern.permute.xlu0 0
        %1710 = vperm.xlu0 %1709, %v1707
        %v1711 = vpop.permute.xlu0 %1710
        %vm1713 = vcmask 523264
        %v1715 = vsel %vm1713, %v1706, 0
        %1717 = vmatprep.subr.mxu0 0.0
        %1718 = vmatpush1.msra.mxu0 0.0
        %1719 = vmatprep.subr.mxu0 0.0
        %1720 = vmatpush1.msra.mxu0 0.0
        %1721 = vmatprep.subr.mxu0 0.0
        %1722 = vmatpush1.msra.mxu0 0.0
        %1723 = vmatprep.subr.mxu0 0.0
        %1724 = vmatpush1.msra.mxu0 0.0
        %1725 = vmatprep.subr.mxu0 0.0
        %1726 = vmatpush1.msra.mxu0 0.0
        %1727 = vmatprep.subr.mxu0 0.0
        %1728 = vmatpush1.msra.mxu0 0.0
        %1729 = vmatprep.subr.mxu0 0.0
        %1730 = vmatpush1.msra.mxu0 0.0
        %1731 = vmatprep.subr.mxu0 0.0
        %1732 = vmatpush1.msra.mxu0 0.0
        %1733 = vmatprep.subr.mxu0 %v1704
        %1734 = vmatpush1.msra.mxu0 %v1703
        %1735 = vmatprep.subr.mxu0 %v1701
        %1736 = vmatpush1.msra.mxu0 %v1700
        %1737 = vmatprep.subr.mxu0 %v1698
        %1738 = vmatpush1.msra.mxu0 %v1697
        %1739 = vmatprep.subr.mxu0 %v1695
        %1740 = vmatpush1.msra.mxu0 %v1694
        %1741 = vmatprep.subr.mxu0 %v1692
        %1742 = vmatpush1.msra.mxu0 %v1691
        %1743 = vmatprep.subr.mxu0 %v1689
        %1744 = vmatpush1.msra.mxu0 %v1688
        %1745 = vmatprep.subr.mxu0 %v1686
        %1746 = vmatpush1.msra.mxu0 %v1685
        %1747 = vmatprep.subr.mxu0 %v1683
        %1748 = vmatpush1.msra.mxu0 %v1682
        %1749 = vmatprep.subr.mxu0 0.0
        %1750 = vmatpush2.msra.mxu0 0.0
        %1751 = vmatprep.subr.mxu0 0.0
        %1752 = vmatpush2.msra.mxu0 0.0
        %1753 = vmatprep.subr.mxu0 0.0
        %1754 = vmatpush2.msra.mxu0 0.0
        %1755 = vmatprep.subr.mxu0 0.0
        %1756 = vmatpush2.msra.mxu0 0.0
        %1757 = vmatprep.subr.mxu0 0.0
        %1758 = vmatpush2.msra.mxu0 0.0
        %1759 = vmatprep.subr.mxu0 0.0
        %1760 = vmatpush2.msra.mxu0 0.0
        %1761 = vmatprep.subr.mxu0 0.0
        %1762 = vmatpush2.msra.mxu0 0.0
        %1763 = vmatprep.subr.mxu0 0.0
        %1764 = vmatpush2.msra.mxu0 0.0
        %1765 = vmatprep.subr.mxu0 0.0
        %1766 = vmatpush2.msra.mxu0 0.0
        %1767 = vmatprep.subr.mxu0 0.0
        %1768 = vmatpush2.msra.mxu0 0.0
        %1769 = vmatprep.subr.mxu0 0.0
        %1770 = vmatpush2.msra.mxu0 0.0
        %1771 = vmatprep.subr.mxu0 0.0
        %1772 = vmatpush2.msra.mxu0 0.0
        %1773 = vmatprep.subr.mxu0 0.0
        %1774 = vmatpush2.msra.mxu0 0.0
        %1775 = vmatprep.subr.mxu0 0.0
        %1776 = vmatpush2.msra.mxu0 0.0
        %1777 = vmatprep.subr.mxu0 0.0
        %1778 = vmatpush2.msra.mxu0 0.0
        %1779 = vmatprep.subr.mxu0 0.0
        %1780 = vmatpush2.msra.mxu0 0.0
        %1781 = vmatprep.mubr.f32.mxu0 0.0
        %1782 = vmatmul.mubr.f32.gmra.mxu0 %v1715
        %v1783 = vpop.f32.mrf.mxu0
        %v1784 = vadd.f32 %v1711, %v1783
        %v1785 = vpop.f32.mrf.mxu0
        %v1786 = vadd.f32 %v1711, %v1785
        %1787 = vdwg.mxu0
        %1788 = vmatprep.subr.mxu0 0.0
        %1789 = vmatpush1.msra.mxu0 0.0
        %1790 = vmatprep.subr.mxu0 0.0
        %1791 = vmatpush1.msra.mxu0 0.0
        %1792 = vmatprep.subr.mxu0 0.0
        %1793 = vmatpush1.msra.mxu0 0.0
        %1794 = vmatprep.subr.mxu0 0.0
        %1795 = vmatpush1.msra.mxu0 0.0
        %1796 = vmatprep.subr.mxu0 0.0
        %1797 = vmatpush1.msra.mxu0 0.0
        %1798 = vmatprep.subr.mxu0 0.0
        %1799 = vmatpush1.msra.mxu0 0.0
        %1800 = vmatprep.subr.mxu0 0.0
        %1801 = vmatpush1.msra.mxu0 0.0
        %1802 = vmatprep.subr.mxu0 0.0
        %1803 = vmatpush1.msra.mxu0 0.0
        %1804 = vmatprep.subr.mxu0 0.0
        %1805 = vmatpush1.msra.mxu0 %v1705
        %1806 = vmatprep.subr.mxu0 0.0
        %1807 = vmatpush1.msra.mxu0 %v1702
        %1808 = vmatprep.subr.mxu0 0.0
        %1809 = vmatpush1.msra.mxu0 %v1699
        %1810 = vmatprep.subr.mxu0 0.0
        %1811 = vmatpush1.msra.mxu0 %v1696
        %1812 = vmatprep.subr.mxu0 0.0
        %1813 = vmatpush1.msra.mxu0 %v1693
        %1814 = vmatprep.subr.mxu0 0.0
        %1815 = vmatpush1.msra.mxu0 %v1690
        %1816 = vmatprep.subr.mxu0 0.0
        %1817 = vmatpush1.msra.mxu0 %v1687
        %1818 = vmatprep.subr.mxu0 0.0
        %1819 = vmatpush1.msra.mxu0 %v1684
        %1820 = vmatprep.subr.mxu0 0.0
        %1821 = vmatpush2.msra.mxu0 0.0
        %1822 = vmatprep.subr.mxu0 0.0
        %1823 = vmatpush2.msra.mxu0 0.0
        %1824 = vmatprep.subr.mxu0 0.0
        %1825 = vmatpush2.msra.mxu0 0.0
        %1826 = vmatprep.subr.mxu0 0.0
        %1827 = vmatpush2.msra.mxu0 0.0
        %1828 = vmatprep.subr.mxu0 0.0
        %1829 = vmatpush2.msra.mxu0 0.0
        %1830 = vmatprep.subr.mxu0 0.0
        %1831 = vmatpush2.msra.mxu0 0.0
        %1832 = vmatprep.subr.mxu0 0.0
        %1833 = vmatpush2.msra.mxu0 0.0
        %1834 = vmatprep.subr.mxu0 0.0
        %1835 = vmatpush2.msra.mxu0 0.0
        %1836 = vmatprep.subr.mxu0 0.0
        %1837 = vmatpush2.msra.mxu0 0.0
        %1838 = vmatprep.subr.mxu0 0.0
        %1839 = vmatpush2.msra.mxu0 0.0
        %1840 = vmatprep.subr.mxu0 0.0
        %1841 = vmatpush2.msra.mxu0 0.0
        %1842 = vmatprep.subr.mxu0 0.0
        %1843 = vmatpush2.msra.mxu0 0.0
        %1844 = vmatprep.subr.mxu0 0.0
        %1845 = vmatpush2.msra.mxu0 0.0
        %1846 = vmatprep.subr.mxu0 0.0
        %1847 = vmatpush2.msra.mxu0 0.0
        %1848 = vmatprep.subr.mxu0 0.0
        %1849 = vmatpush2.msra.mxu0 0.0
        %1850 = vmatprep.subr.mxu0 0.0
        %1851 = vmatpush2.msra.mxu0 0.0
        %1852 = vmatprep.mubr.f32.mxu0 0.0
        %1853 = vmatmul.mubr.f32.gmra.mxu0 %v1715
        %v1854 = vpop.f32.mrf.mxu0
        %v1855 = vadd.f32 %v1711, %v1854
        %v1856 = vpop.f32.mrf.mxu0
        %1857 = vdwg.mxu0
        %1858 = vst [vmem:[%s232] sm:$0xff] %v1784
        %1859 = vst [vmem:[%s232 + $0x8] sm:$0xff] %v1786
        %1860 = vst [vmem:[%s232 + $0x10] sm:$0xff] %v1855
        %s1861 = sand.u32 %s138, 1
        %s1862 = scalar_lea.sflag [#allocation5], %s1861
        %s1863 = sand.u32 %s138, 1
        %s1864 = smul.addr %s1863, 24
        %s1865 = scalar_lea.vmem [#allocation6], %s1864
        // Predicated region
        $region45: #{tpu_custom_call.1} parent=39 // pred_check
          %p1866 = pneg %p148
        $region46: #{tpu_custom_call.1} parent=39 // pred_check_branch
          %1868 = sbr.rel (%p1866) target = $region48
        $region47: #{tpu_custom_call.1} parent=39 // pred_region
          %s1870 = ssub.s32 384, 384
          %1871 = vsyncadd %s1862, %s1870
          %s1872 = smul.addr %s20, 3
          %s1873 = smul.addr %s1872, 128
          %s1874 = scalar_lea.hbm %s5, %s1873
          %s1876 = sshll.u32 %s1865, 4
          %s1877 = int_to_ptr.vmem [resolvable:$true] %s1876
          %1879 = dma.vmem_to_hbm [thread:$0]  %s1877, 384, %s1874, %s1862
        $region48: #{tpu_custom_call.1} parent=39 // pred_fallthru
          _
      $region40: #{tpu_custom_call.1} parent=5 // pred_fallthru
        _
      %p1880 = scmp.le.s32.totalorder 2, %s15
      // Predicated region
      $region49: #{tpu_custom_call.1} parent=5 // pred_check
        %p1881 = pneg %p1880
      $region50: #{tpu_custom_call.1} parent=5 // pred_check_branch
        %1883 = sbr.rel (%p1881) target = $region52
      $region51: #{tpu_custom_call.1} parent=5 // pred_region
        %s1884 = ssub.s32 %s15, 2
        // Predicated region
        $region53: #{tpu_custom_call.1} parent=51 // pred_check
          %p1885 = pneg %p154
        $region54: #{tpu_custom_call.1} parent=51 // pred_check_branch
          %1887 = sbr.rel (%p1885) target = $region56
        $region55: #{tpu_custom_call.1} parent=51 // pred_region
          %s1888 = sand.u32 %s139, 1
          %s1889 = scalar_lea.sflag [#allocation5], %s1888
          %s1890 = sand.u32 %s139, 1
          %s1891 = smul.addr %s1890, 24
          %s1892 = scalar_lea.vmem [#allocation6], %s1891
          %1893 = dma.done %s1889, 384
        $region56: #{tpu_custom_call.1} parent=51 // pred_fallthru
          _
      $region52: #{tpu_custom_call.1} parent=5 // pred_fallthru
        _
    $region6: #{tpu_custom_call.1} parent=1 // loop_footer
      %s19 = sadd.s32 1, %s15
    $region7: #{tpu_custom_call.1} parent=1 // loop_footer_branch
      %14 = sbr.rel target = $region3
    $region8: #{tpu_custom_call.1} parent=1 // loop_exit
      _
    %1894 = vsyncpa [#allocation4], 1
    %s1895 = scalar_lea.sflag [#allocation4], 1
    %1896 = vsyncpa %s1895, 1
    %1897 = vsyncpa [#allocation5], 1
    %s1898 = scalar_lea.sflag [#allocation5], 1
    %1899 = vsyncpa %s1898, 1

</llo_original>
